<compile_context>
chip_gen: v7x
topology: tpu7x:2x2x1
jax: 0.10.0
libtpu: 0.0.40
codegen_flags: <defaults>
</compile_context>

<pallas_src>
import jax
import jax.numpy as jnp
from jax.experimental import pallas as pl
from jax.experimental.pallas import tpu as pltpu

_LN_EPS = 1e-6        # nn.LayerNorm(in_dim, eps=1e-06) in the source module
_MXU_OUT_PAD = 128    # lane-padded width of the final projection inside the kernel


def _layer_norm(x, gamma, beta, eps=_LN_EPS):
    mean = jnp.mean(x, axis=-1, keepdims=True)
    var = jnp.mean(jnp.square(x - mean), axis=-1, keepdims=True)
    return (x - mean) * jax.lax.rsqrt(var + eps) * gamma + beta


def _gelu_tanh(x):
    c = 0.7978845608028654  # sqrt(2/pi)
    return 0.5 * x * (1.0 + jnp.tanh(c * (x + 0.044715 * x * x * x)))


def _enzyme_site_kernel(x_ref,
                        ln1g_ref, ln1b_ref, w1_ref, b1_ref, w2_ref, b2_ref,
                        ln2g_ref, ln2b_ref, w3_ref, b3_ref, w4_ref, b4_ref,
                        out_ref):
    # x tile: (tile_n, D) bf16 -> f32 for LayerNorm/GELU.
    # Padded rows (n_pad > n) hit LN with mean=var=0; eps=1e-6 keeps rsqrt finite and the
    # result (just beta) is sliced off in the wrapper. Do not lower eps.
    x = x_ref[...].astype(jnp.float32)

    # ---- brige_model: LN -> Linear(D, 2D) -> GELU -> (Dropout=id) -> Linear(2D, H) ----
    h = _layer_norm(x, ln1g_ref[...], ln1b_ref[...])
    h = jnp.dot(h.astype(jnp.bfloat16), w1_ref[...],
                preferred_element_type=jnp.float32) + b1_ref[...]
    h = _gelu_tanh(h)
    h = jnp.dot(h.astype(jnp.bfloat16), w2_ref[...],
                preferred_element_type=jnp.float32) + b2_ref[...]

    # ---- active_net: LN -> Linear(H, 2H) -> GELU -> (Dropout=id) -> Linear(2H, 2 pad 128) ----
    g = _layer_norm(h, ln2g_ref[...], ln2b_ref[...])
    g = jnp.dot(g.astype(jnp.bfloat16), w3_ref[...],
                preferred_element_type=jnp.float32) + b3_ref[...]
    g = _gelu_tanh(g)
    out = jnp.dot(g.astype(jnp.bfloat16), w4_ref[...],
                  preferred_element_type=jnp.float32) + b4_ref[...]      # (tile_n, 128)

    # Lane-dense transposed store: keep only the real output rows -> (out_dim, tile_n).
    out_t = jnp.transpose(out)                                           # XLU; cheap vs the dots
    out_ref[...] = out_t[:out_ref.shape[0], :].astype(out_ref.dtype)


def prepare_params(params):
    """One-time weight prep (hoisted out of the forward path): bf16 matmul weights,
    f32 biases/LN params, lane-padded (2 -> 128) final projection."""
    out_dim = params["w4"].shape[1]
    pad = _MXU_OUT_PAD - out_dim
    return {
        "out_dim": int(out_dim),
        "ln1_g": params["ln1_g"].astype(jnp.float32),
        "ln1_b": params["ln1_b"].astype(jnp.float32),
        "w1": params["w1"].astype(jnp.bfloat16),
        "b1": params["b1"].astype(jnp.float32),
        "w2": params["w2"].astype(jnp.bfloat16),
        "b2": params["b2"].astype(jnp.float32),
        "ln2_g": params["ln2_g"].astype(jnp.float32),
        "ln2_b": params["ln2_b"].astype(jnp.float32),
        "w3": params["w3"].astype(jnp.bfloat16),
        "b3": params["b3"].astype(jnp.float32),
        "w4": jnp.pad(params["w4"], ((0, 0), (0, pad))).astype(jnp.bfloat16),
        "b4": jnp.pad(params["b4"], ((0, 0), (0, pad))).astype(jnp.float32),
    }


def _vmem_limit_bytes(default=32 * 1024 * 1024):
    # Generation-aware: ~3/4 of physical VMEM -> ~96 MiB on v5e/v6e (128 MiB), ~48 MiB on v7x.
    try:
        cap = int(pltpu.get_tpu_info().vmem_capacity_bytes)
        return max(default, (3 * cap) // 4)
    except Exception:
        return default


def _pick_tile_n(n, d):
    # Big tiles amortize the ~0.35us per-grid-step overhead, but keep >=2 grid steps so v7x can
    # shard row tiles across its 2 TensorCores; cap at 256 for wide D so the (tile_n, 2D) f32
    # intermediates don't blow VMEM next to the resident weights.
    candidates = (256, 128) if d >= 1280 else (512, 256, 128)
    for t in candidates:
        if pl.cdiv(n, t) >= 2:
            return t
    return 128


def enzyme_active_site_forward(node_feature, prepared, *, tile_n=None):
    """node_feature: [N, enzyme_out_dim] -> [N, 2] float32. `prepared` = prepare_params(params)."""
    n, d = node_feature.shape
    h = prepared["w2"].shape[1]
    out_dim = prepared["out_dim"]
    # TODO(synk): if the real enzyme_out_dim is not a multiple of 128 (ESM dims usually are),
    #             pad D on the host (adjusting the LayerNorm divisor) before calling this.
    assert d % 128 == 0 and h % 128 == 0, "feature dims must be lane-aligned (multiples of 128)"

    if tile_n is None:
        tile_n = _pick_tile_n(n, d)

    n_pad = pl.cdiv(n, tile_n) * tile_n
    x = node_feature.astype(jnp.bfloat16)   # halves input DMA bytes; LN runs in f32 in-kernel
    if n_pad != n:
        x = jnp.pad(x, ((0, n_pad - n), (0, 0)))

    grid = (n_pad // tile_n,)

    def resident(shape):
        # Full-array block, constant index map, single-buffered:
        # DMA'd once and stays resident in VMEM across the whole row grid.
        return pl.BlockSpec(shape, lambda i: (0, 0), pipeline_mode=pl.Buffered(1))

    in_specs = [
        # x tile is pipelined over N (default double-buffering). If the x DMA is ever exposed
        # at tiny D, deepen only this spec with pipeline_mode=pl.Buffered(3).
        pl.BlockSpec((tile_n, d), lambda i: (i, 0)),
        resident((1, d)), resident((1, d)),                        # ln1 gamma/beta
        resident((d, 2 * d)), resident((1, 2 * d)),                # w1, b1
        resident((2 * d, h)), resident((1, h)),                    # w2, b2
        resident((1, h)), resident((1, h)),                        # ln2 gamma/beta
        resident((h, 2 * h)), resident((1, 2 * h)),                # w3, b3
        resident((2 * h, _MXU_OUT_PAD)), resident((1, _MXU_OUT_PAD)),  # w4, b4 (lane-padded)
    ]
    # Transposed, lane-dense output: (out_dim, tile_n) block of a (out_dim, n_pad) array.
    out_specs = pl.BlockSpec((out_dim, tile_n), lambda i: (0, i))

    flops = 2 * n_pad * (d * 2 * d + 2 * d * h + h * 2 * h + 2 * h * _MXU_OUT_PAD)
    transcendentals = n_pad * (2 * d + 2 * h)          # one tanh per GELU element
    bytes_accessed = (
        n_pad * d * 2                                  # x (bf16)
        + out_dim * n_pad * 4                          # out (f32, transposed layout)
        + 2 * (d * 2 * d + 2 * d * h + h * 2 * h + 2 * h * _MXU_OUT_PAD)  # bf16 weights
        + 4 * (2 * d + h + 2 * h + _MXU_OUT_PAD)       # f32 biases
        + 4 * (2 * d + 2 * h)                          # LN params
    )

    out_t = pl.pallas_call(
        _enzyme_site_kernel,
        out_shape=jax.ShapeDtypeStruct((out_dim, n_pad), jnp.float32),
        grid=grid,
        in_specs=in_specs,
        out_specs=out_specs,
        compiler_params=pltpu.CompilerParams(
            dimension_semantics=("parallel",),     # independent row tiles (v7x: 2 TCs)
            vmem_limit_bytes=_vmem_limit_bytes(),
        ),
        cost_estimate=pl.CostEstimate(
            flops=int(flops),
            transcendentals=int(transcendentals),
            bytes_accessed=int(bytes_accessed),
        ),
    )(x,
      prepared["ln1_g"], prepared["ln1_b"], prepared["w1"], prepared["b1"],
      prepared["w2"], prepared["b2"],
      prepared["ln2_g"], prepared["ln2_b"], prepared["w3"], prepared["b3"],
      prepared["w4"], prepared["b4"])

    # (out_dim, n_pad) -> (n, out_dim); the tiny transpose is a cheap XLA op on 2 rows.
    return out_t[:, :n].T


def init_params(key, enzyme_out_dim, bridge_hidden_dim):
    ks = jax.random.split(key, 8)
    scale = 0.02

    def w(k, shape):
        return (scale * jax.random.normal(k, shape)).astype(jnp.float32)

    d = enzyme_out_dim
    h = bridge_hidden_dim
    return {
        # brige_model: LayerNorm(d), Linear(d, 2d), Linear(2d, h)
        "ln1_g": jnp.ones((1, d), jnp.float32),
        "ln1_b": jnp.zeros((1, d), jnp.float32),
        "w1": w(ks[0], (d, 2 * d)),
        "b1": w(ks[1], (1, 2 * d)),
        "w2": w(ks[2], (2 * d, h)),
        "b2": w(ks[3], (1, h)),
        # active_net: LayerNorm(h), Linear(h, 2h), Linear(2h, 2)
        "ln2_g": jnp.ones((1, h), jnp.float32),
        "ln2_b": jnp.zeros((1, h), jnp.float32),
        "w3": w(ks[4], (h, 2 * h)),
        "b3": w(ks[5], (1, 2 * h)),
        "w4": w(ks[6], (2 * h, 2)),
        "b4": w(ks[7], (1, 2)),
    }


def _reference(node_feature, p):
    """Pure-JAX reference with the same bf16-at-the-dot (and bf16 input) numerics as the kernel."""
    def bf(a):
        return a.astype(jnp.bfloat16)

    x = node_feature.astype(jnp.bfloat16).astype(jnp.float32)   # kernel streams x as bf16
    h = _layer_norm(x, p["ln1_g"], p["ln1_b"])
    h = jnp.dot(bf(h), bf(p["w1"]), preferred_element_type=jnp.float32) + p["b1"]
    h = _gelu_tanh(h)
    h = jnp.dot(bf(h), bf(p["w2"]), preferred_element_type=jnp.float32) + p["b2"]
    g = _layer_norm(h, p["ln2_g"], p["ln2_b"])
    g = jnp.dot(bf(g), bf(p["w3"]), preferred_element_type=jnp.float32) + p["b3"]
    g = _gelu_tanh(g)
    return jnp.dot(bf(g), bf(p["w4"]), preferred_element_type=jnp.float32) + p["b4"]


if __name__ == "__main__":
    N = 200               # residues; not a tile multiple -> exercises row padding + 2-step grid
    ENZYME_OUT_DIM = 128  # lane-aligned enzyme_attn_model.output_dim (real ESM dims are /128 too)
    BRIDGE_HIDDEN = 128   # bridge_hidden_dim module default

    key = jax.random.PRNGKey(0)
    k_feat, k_param = jax.random.split(key)
    node_feature = jax.random.normal(k_feat, (N, ENZYME_OUT_DIM), dtype=jnp.float32)
    params = init_params(k_param, ENZYME_OUT_DIM, BRIDGE_HIDDEN)

    prepared = prepare_params(params)   # one-time: bf16 weights, lane-padded final projection

    out = enzyme_active_site_forward(node_feature, prepared)   # auto tile_n (128 here, 2 steps)
    out = jax.block_until_ready(out)

    ref = _reference(node_feature, params)
    assert out.shape == (N, 2), out.shape
    assert jnp.allclose(out, ref, atol=3e-3, rtol=3e-3), "mismatch vs. pure-JAX reference"

    print("KERNEL_OK")
</pallas_src>

<mosaic_0001>
module attributes {stable_mosaic.version = 11 : i64} {
  func.func @_enzyme_site_kernel(%arg0: i32, %arg1: memref<128x128xbf16, #tpu.memory_space<vmem>>, %arg2: memref<1x128xf32, #tpu.memory_space<vmem>>, %arg3: memref<1x128xf32, #tpu.memory_space<vmem>>, %arg4: memref<128x256xbf16, #tpu.memory_space<vmem>>, %arg5: memref<1x256xf32, #tpu.memory_space<vmem>>, %arg6: memref<256x128xbf16, #tpu.memory_space<vmem>>, %arg7: memref<1x128xf32, #tpu.memory_space<vmem>>, %arg8: memref<1x128xf32, #tpu.memory_space<vmem>>, %arg9: memref<1x128xf32, #tpu.memory_space<vmem>>, %arg10: memref<128x256xbf16, #tpu.memory_space<vmem>>, %arg11: memref<1x256xf32, #tpu.memory_space<vmem>>, %arg12: memref<256x128xbf16, #tpu.memory_space<vmem>>, %arg13: memref<1x128xf32, #tpu.memory_space<vmem>>, %arg14: memref<2x128xf32, #tpu.memory_space<vmem>>) attributes {dimension_semantics = [#tpu.dimension_semantics<parallel>], iteration_bounds = array<i64: 2>, scalar_prefetch = 0 : i64, scratch_operands = 0 : i64, tpu.core_type = #tpu.core_type<tc>, window_params = [{transform_indices = @transform_0, window_bounds = array<i64: 128, 128>}, {pipeline_mode = #tpu.pipeline_mode<synchronous>, transform_indices = @transform_1, window_bounds = array<i64: 1, 128>}, {pipeline_mode = #tpu.pipeline_mode<synchronous>, transform_indices = @transform_2, window_bounds = array<i64: 1, 128>}, {pipeline_mode = #tpu.pipeline_mode<synchronous>, transform_indices = @transform_3, window_bounds = array<i64: 128, 256>}, {pipeline_mode = #tpu.pipeline_mode<synchronous>, transform_indices = @transform_4, window_bounds = array<i64: 1, 256>}, {pipeline_mode = #tpu.pipeline_mode<synchronous>, transform_indices = @transform_5, window_bounds = array<i64: 256, 128>}, {pipeline_mode = #tpu.pipeline_mode<synchronous>, transform_indices = @transform_6, window_bounds = array<i64: 1, 128>}, {pipeline_mode = #tpu.pipeline_mode<synchronous>, transform_indices = @transform_7, window_bounds = array<i64: 1, 128>}, {pipeline_mode = #tpu.pipeline_mode<synchronous>, transform_indices = @transform_8, window_bounds = array<i64: 1, 128>}, {pipeline_mode = #tpu.pipeline_mode<synchronous>, transform_indices = @transform_9, window_bounds = array<i64: 128, 256>}, {pipeline_mode = #tpu.pipeline_mode<synchronous>, transform_indices = @transform_10, window_bounds = array<i64: 1, 256>}, {pipeline_mode = #tpu.pipeline_mode<synchronous>, transform_indices = @transform_11, window_bounds = array<i64: 256, 128>}, {pipeline_mode = #tpu.pipeline_mode<synchronous>, transform_indices = @transform_12, window_bounds = array<i64: 1, 128>}, {transform_indices = @transform_13, window_bounds = array<i64: 2, 128>}]} {
    %c0 = arith.constant 0 : index
    %c0_0 = arith.constant 0 : index
    %0 = vector.load %arg1[%c0, %c0_0] : memref<128x128xbf16, #tpu.memory_space<vmem>>, vector<128x128xbf16>
    %1 = arith.extf %0 : vector<128x128xbf16> to vector<128x128xf32>
    %c0_1 = arith.constant 0 : index
    %c0_2 = arith.constant 0 : index
    %2 = vector.load %arg2[%c0_1, %c0_2] : memref<1x128xf32, #tpu.memory_space<vmem>>, vector<1x128xf32>
    %c0_3 = arith.constant 0 : index
    %c0_4 = arith.constant 0 : index
    %3 = vector.load %arg3[%c0_3, %c0_4] : memref<1x128xf32, #tpu.memory_space<vmem>>, vector<1x128xf32>
    %cst = arith.constant dense<0.000000e+00> : vector<128xf32>
    %4 = vector.multi_reduction <add>, %1, %cst [1] : vector<128x128xf32> to vector<128xf32>
    %5 = vector.shape_cast %4 : vector<128xf32> to vector<128x1xf32>
    %cst_5 = arith.constant 1.280000e+02 : f32
    %6 = vector.broadcast %cst_5 : f32 to vector<128x1xf32>
    %7 = arith.divf %5, %6 : vector<128x1xf32>
    %8 = vector.broadcast %7 : vector<128x1xf32> to vector<128x128xf32>
    %9 = arith.subf %1, %8 : vector<128x128xf32>
    %10 = arith.mulf %9, %9 : vector<128x128xf32>
    %cst_6 = arith.constant dense<0.000000e+00> : vector<128xf32>
    %11 = vector.multi_reduction <add>, %10, %cst_6 [1] : vector<128x128xf32> to vector<128xf32>
    %12 = vector.shape_cast %11 : vector<128xf32> to vector<128x1xf32>
    %cst_7 = arith.constant 1.280000e+02 : f32
    %13 = vector.broadcast %cst_7 : f32 to vector<128x1xf32>
    %14 = arith.divf %12, %13 : vector<128x1xf32>
    %15 = vector.broadcast %7 : vector<128x1xf32> to vector<128x128xf32>
    %16 = arith.subf %1, %15 : vector<128x128xf32>
    %cst_8 = arith.constant 9.99999997E-7 : f32
    %17 = vector.broadcast %cst_8 : f32 to vector<128x1xf32>
    %18 = arith.addf %14, %17 : vector<128x1xf32>
    %19 = math.rsqrt %18 : vector<128x1xf32>
    %20 = vector.broadcast %19 : vector<128x1xf32> to vector<128x128xf32>
    %21 = arith.mulf %16, %20 : vector<128x128xf32>
    %22 = vector.broadcast %2 : vector<1x128xf32> to vector<128x128xf32>
    %23 = arith.mulf %21, %22 : vector<128x128xf32>
    %24 = vector.broadcast %3 : vector<1x128xf32> to vector<128x128xf32>
    %25 = arith.addf %23, %24 : vector<128x128xf32>
    %26 = arith.truncf %25 : vector<128x128xf32> to vector<128x128xbf16>
    %c0_9 = arith.constant 0 : index
    %c0_10 = arith.constant 0 : index
    %27 = vector.load %arg4[%c0_9, %c0_10] : memref<128x256xbf16, #tpu.memory_space<vmem>>, vector<128x256xbf16>
    %cst_11 = arith.constant dense<0.000000e+00> : vector<128x256xf32>
    %28 = tpu.matmul %26, %27, %cst_11 {dimension_numbers = #tpu.dot_dimension_numbers<[1], [0], [0], [1], [0, 0, 1, 1], [], []>} : vector<128x128xbf16>, vector<128x256xbf16>, vector<128x256xf32> -> vector<128x256xf32>
    %c0_12 = arith.constant 0 : index
    %c0_13 = arith.constant 0 : index
    %29 = vector.load %arg5[%c0_12, %c0_13] : memref<1x256xf32, #tpu.memory_space<vmem>>, vector<1x256xf32>
    %30 = vector.broadcast %29 : vector<1x256xf32> to vector<128x256xf32>
    %31 = arith.addf %28, %30 : vector<128x256xf32>
    %cst_14 = arith.constant 5.000000e-01 : f32
    %32 = vector.broadcast %cst_14 : f32 to vector<128x256xf32>
    %33 = arith.mulf %32, %31 : vector<128x256xf32>
    %cst_15 = arith.constant 4.471500e-02 : f32
    %34 = vector.broadcast %cst_15 : f32 to vector<128x256xf32>
    %35 = arith.mulf %34, %31 : vector<128x256xf32>
    %36 = arith.mulf %35, %31 : vector<128x256xf32>
    %37 = arith.mulf %36, %31 : vector<128x256xf32>
    %38 = arith.addf %31, %37 : vector<128x256xf32>
    %cst_16 = arith.constant 0.797884583 : f32
    %39 = vector.broadcast %cst_16 : f32 to vector<128x256xf32>
    %40 = arith.mulf %39, %38 : vector<128x256xf32>
    %41 = math.tanh %40 : vector<128x256xf32>
    %cst_17 = arith.constant 1.000000e+00 : f32
    %42 = vector.broadcast %cst_17 : f32 to vector<128x256xf32>
    %43 = arith.addf %42, %41 : vector<128x256xf32>
    %44 = arith.mulf %33, %43 : vector<128x256xf32>
    %45 = arith.truncf %44 : vector<128x256xf32> to vector<128x256xbf16>
    %c0_18 = arith.constant 0 : index
    %c0_19 = arith.constant 0 : index
    %46 = vector.load %arg6[%c0_18, %c0_19] : memref<256x128xbf16, #tpu.memory_space<vmem>>, vector<256x128xbf16>
    %cst_20 = arith.constant dense<0.000000e+00> : vector<128x128xf32>
    %47 = tpu.matmul %45, %46, %cst_20 {dimension_numbers = #tpu.dot_dimension_numbers<[1], [0], [0], [1], [0, 0, 1, 1], [], []>} : vector<128x256xbf16>, vector<256x128xbf16>, vector<128x128xf32> -> vector<128x128xf32>
    %c0_21 = arith.constant 0 : index
    %c0_22 = arith.constant 0 : index
    %48 = vector.load %arg7[%c0_21, %c0_22] : memref<1x128xf32, #tpu.memory_space<vmem>>, vector<1x128xf32>
    %49 = vector.broadcast %48 : vector<1x128xf32> to vector<128x128xf32>
    %50 = arith.addf %47, %49 : vector<128x128xf32>
    %c0_23 = arith.constant 0 : index
    %c0_24 = arith.constant 0 : index
    %51 = vector.load %arg8[%c0_23, %c0_24] : memref<1x128xf32, #tpu.memory_space<vmem>>, vector<1x128xf32>
    %c0_25 = arith.constant 0 : index
    %c0_26 = arith.constant 0 : index
    %52 = vector.load %arg9[%c0_25, %c0_26] : memref<1x128xf32, #tpu.memory_space<vmem>>, vector<1x128xf32>
    %cst_27 = arith.constant dense<0.000000e+00> : vector<128xf32>
    %53 = vector.multi_reduction <add>, %50, %cst_27 [1] : vector<128x128xf32> to vector<128xf32>
    %54 = vector.shape_cast %53 : vector<128xf32> to vector<128x1xf32>
    %cst_28 = arith.constant 1.280000e+02 : f32
    %55 = vector.broadcast %cst_28 : f32 to vector<128x1xf32>
    %56 = arith.divf %54, %55 : vector<128x1xf32>
    %57 = vector.broadcast %56 : vector<128x1xf32> to vector<128x128xf32>
    %58 = arith.subf %50, %57 : vector<128x128xf32>
    %59 = arith.mulf %58, %58 : vector<128x128xf32>
    %cst_29 = arith.constant dense<0.000000e+00> : vector<128xf32>
    %60 = vector.multi_reduction <add>, %59, %cst_29 [1] : vector<128x128xf32> to vector<128xf32>
    %61 = vector.shape_cast %60 : vector<128xf32> to vector<128x1xf32>
    %cst_30 = arith.constant 1.280000e+02 : f32
    %62 = vector.broadcast %cst_30 : f32 to vector<128x1xf32>
    %63 = arith.divf %61, %62 : vector<128x1xf32>
    %64 = vector.broadcast %56 : vector<128x1xf32> to vector<128x128xf32>
    %65 = arith.subf %50, %64 : vector<128x128xf32>
    %cst_31 = arith.constant 9.99999997E-7 : f32
    %66 = vector.broadcast %cst_31 : f32 to vector<128x1xf32>
    %67 = arith.addf %63, %66 : vector<128x1xf32>
    %68 = math.rsqrt %67 : vector<128x1xf32>
    %69 = vector.broadcast %68 : vector<128x1xf32> to vector<128x128xf32>
    %70 = arith.mulf %65, %69 : vector<128x128xf32>
    %71 = vector.broadcast %51 : vector<1x128xf32> to vector<128x128xf32>
    %72 = arith.mulf %70, %71 : vector<128x128xf32>
    %73 = vector.broadcast %52 : vector<1x128xf32> to vector<128x128xf32>
    %74 = arith.addf %72, %73 : vector<128x128xf32>
    %75 = arith.truncf %74 : vector<128x128xf32> to vector<128x128xbf16>
    %c0_32 = arith.constant 0 : index
    %c0_33 = arith.constant 0 : index
    %76 = vector.load %arg10[%c0_32, %c0_33] : memref<128x256xbf16, #tpu.memory_space<vmem>>, vector<128x256xbf16>
    %cst_34 = arith.constant dense<0.000000e+00> : vector<128x256xf32>
    %77 = tpu.matmul %75, %76, %cst_34 {dimension_numbers = #tpu.dot_dimension_numbers<[1], [0], [0], [1], [0, 0, 1, 1], [], []>} : vector<128x128xbf16>, vector<128x256xbf16>, vector<128x256xf32> -> vector<128x256xf32>
    %c0_35 = arith.constant 0 : index
    %c0_36 = arith.constant 0 : index
    %78 = vector.load %arg11[%c0_35, %c0_36] : memref<1x256xf32, #tpu.memory_space<vmem>>, vector<1x256xf32>
    %79 = vector.broadcast %78 : vector<1x256xf32> to vector<128x256xf32>
    %80 = arith.addf %77, %79 : vector<128x256xf32>
    %cst_37 = arith.constant 5.000000e-01 : f32
    %81 = vector.broadcast %cst_37 : f32 to vector<128x256xf32>
    %82 = arith.mulf %81, %80 : vector<128x256xf32>
    %cst_38 = arith.constant 4.471500e-02 : f32
    %83 = vector.broadcast %cst_38 : f32 to vector<128x256xf32>
    %84 = arith.mulf %83, %80 : vector<128x256xf32>
    %85 = arith.mulf %84, %80 : vector<128x256xf32>
    %86 = arith.mulf %85, %80 : vector<128x256xf32>
    %87 = arith.addf %80, %86 : vector<128x256xf32>
    %cst_39 = arith.constant 0.797884583 : f32
    %88 = vector.broadcast %cst_39 : f32 to vector<128x256xf32>
    %89 = arith.mulf %88, %87 : vector<128x256xf32>
    %90 = math.tanh %89 : vector<128x256xf32>
    %cst_40 = arith.constant 1.000000e+00 : f32
    %91 = vector.broadcast %cst_40 : f32 to vector<128x256xf32>
    %92 = arith.addf %91, %90 : vector<128x256xf32>
    %93 = arith.mulf %82, %92 : vector<128x256xf32>
    %94 = arith.truncf %93 : vector<128x256xf32> to vector<128x256xbf16>
    %c0_41 = arith.constant 0 : index
    %c0_42 = arith.constant 0 : index
    %95 = vector.load %arg12[%c0_41, %c0_42] : memref<256x128xbf16, #tpu.memory_space<vmem>>, vector<256x128xbf16>
    %cst_43 = arith.constant dense<0.000000e+00> : vector<128x128xf32>
    %96 = tpu.matmul %94, %95, %cst_43 {dimension_numbers = #tpu.dot_dimension_numbers<[1], [0], [0], [1], [0, 0, 1, 1], [], []>} : vector<128x256xbf16>, vector<256x128xbf16>, vector<128x128xf32> -> vector<128x128xf32>
    %c0_44 = arith.constant 0 : index
    %c0_45 = arith.constant 0 : index
    %97 = vector.load %arg13[%c0_44, %c0_45] : memref<1x128xf32, #tpu.memory_space<vmem>>, vector<1x128xf32>
    %98 = vector.broadcast %97 : vector<1x128xf32> to vector<128x128xf32>
    %99 = arith.addf %96, %98 : vector<128x128xf32>
    %100 = tpu.transpose %99, [1, 0] : vector<128x128xf32> -> vector<128x128xf32>
    %101 = vector.extract_strided_slice %100 {offsets = [0, 0], sizes = [2, 128], strides = [1, 1]} : vector<128x128xf32> to vector<2x128xf32>
    %c0_46 = arith.constant 0 : index
    %c0_47 = arith.constant 0 : index
    %102 = vector.load %arg14[%c0_46, %c0_47] : memref<2x128xf32, #tpu.memory_space<vmem>>, vector<2x128xf32>
    tpu.vector_store %arg14[%c0_46, %c0_47], %101 {strides = array<i32>} : memref<2x128xf32, #tpu.memory_space<vmem>>, vector<2x128xf32>,
    return
  }
  func.func @transform_0(%arg0: i32) -> (i32, i32) {
    %c0_i32 = arith.constant 0 : i32
    %c0_i32_0 = arith.constant 0 : i32
    return %arg0, %c0_i32 : i32, i32
  }
  func.func @transform_1(%arg0: i32) -> (i32, i32) {
    %c0_i32 = arith.constant 0 : i32
    %c0_i32_0 = arith.constant 0 : i32
    %c0_i32_1 = arith.constant 0 : i32
    return %c0_i32, %c0_i32_0 : i32, i32
  }
  func.func @transform_2(%arg0: i32) -> (i32, i32) {
    %c0_i32 = arith.constant 0 : i32
    %c0_i32_0 = arith.constant 0 : i32
    %c0_i32_1 = arith.constant 0 : i32
    return %c0_i32, %c0_i32_0 : i32, i32
  }
  func.func @transform_3(%arg0: i32) -> (i32, i32) {
    %c0_i32 = arith.constant 0 : i32
    %c0_i32_0 = arith.constant 0 : i32
    %c0_i32_1 = arith.constant 0 : i32
    return %c0_i32, %c0_i32_0 : i32, i32
  }
  func.func @transform_4(%arg0: i32) -> (i32, i32) {
    %c0_i32 = arith.constant 0 : i32
    %c0_i32_0 = arith.constant 0 : i32
    %c0_i32_1 = arith.constant 0 : i32
    return %c0_i32, %c0_i32_0 : i32, i32
  }
  func.func @transform_5(%arg0: i32) -> (i32, i32) {
    %c0_i32 = arith.constant 0 : i32
    %c0_i32_0 = arith.constant 0 : i32
    %c0_i32_1 = arith.constant 0 : i32
    return %c0_i32, %c0_i32_0 : i32, i32
  }
  func.func @transform_6(%arg0: i32) -> (i32, i32) {
    %c0_i32 = arith.constant 0 : i32
    %c0_i32_0 = arith.constant 0 : i32
    %c0_i32_1 = arith.constant 0 : i32
    return %c0_i32, %c0_i32_0 : i32, i32
  }
  func.func @transform_7(%arg0: i32) -> (i32, i32) {
    %c0_i32 = arith.constant 0 : i32
    %c0_i32_0 = arith.constant 0 : i32
    %c0_i32_1 = arith.constant 0 : i32
    return %c0_i32, %c0_i32_0 : i32, i32
  }
  func.func @transform_8(%arg0: i32) -> (i32, i32) {
    %c0_i32 = arith.constant 0 : i32
    %c0_i32_0 = arith.constant 0 : i32
    %c0_i32_1 = arith.constant 0 : i32
    return %c0_i32, %c0_i32_0 : i32, i32
  }
  func.func @transform_9(%arg0: i32) -> (i32, i32) {
    %c0_i32 = arith.constant 0 : i32
    %c0_i32_0 = arith.constant 0 : i32
    %c0_i32_1 = arith.constant 0 : i32
    return %c0_i32, %c0_i32_0 : i32, i32
  }
  func.func @transform_10(%arg0: i32) -> (i32, i32) {
    %c0_i32 = arith.constant 0 : i32
    %c0_i32_0 = arith.constant 0 : i32
    %c0_i32_1 = arith.constant 0 : i32
    return %c0_i32, %c0_i32_0 : i32, i32
  }
  func.func @transform_11(%arg0: i32) -> (i32, i32) {
    %c0_i32 = arith.constant 0 : i32
    %c0_i32_0 = arith.constant 0 : i32
    %c0_i32_1 = arith.constant 0 : i32
    return %c0_i32, %c0_i32_0 : i32, i32
  }
  func.func @transform_12(%arg0: i32) -> (i32, i32) {
    %c0_i32 = arith.constant 0 : i32
    %c0_i32_0 = arith.constant 0 : i32
    %c0_i32_1 = arith.constant 0 : i32
    return %c0_i32, %c0_i32_0 : i32, i32
  }
  func.func @transform_13(%arg0: i32) -> (i32, i32) {
    %c0_i32 = arith.constant 0 : i32
    %c0_i32_0 = arith.constant 0 : i32
    return %c0_i32, %arg0 : i32, i32
  }
}

</mosaic_0001>

<llo_original>
// kernel: tpu_custom_call.1
$region0: #{tpu_custom_call.1}
  #allocation0 [shape = 'u32[]', space=smem, size = 0x4, offset = 0x4, fixed_abs, tag = 'smem constant byte address 0x4 - core index']
  #allocation1 [shape = 'u32[144,128]{1,0:T(1,128)}', space=vmem, size = 0x12000, scoped, tag = 'internal scratch']
  %s0 = inlined_call_operand.hbm [shape: bf16[256,128], index: 0, kind: input, shape index: {}]
  %s1 = inlined_call_operand.vmem [shape: f32[1,128], index: 1, kind: input, shape index: {}]
  %s2 = inlined_call_operand.vmem [shape: f32[1,128], index: 2, kind: input, shape index: {}]
  %s3 = inlined_call_operand.hbm [shape: bf16[128,256], index: 3, kind: input, shape index: {}]
  %s4 = inlined_call_operand.vmem [shape: f32[1,256], index: 4, kind: input, shape index: {}]
  %s5 = inlined_call_operand.hbm [shape: bf16[256,128], index: 5, kind: input, shape index: {}]
  %s6 = inlined_call_operand.vmem [shape: f32[1,128], index: 6, kind: input, shape index: {}]
  %s7 = inlined_call_operand.vmem [shape: f32[1,128], index: 7, kind: input, shape index: {}]
  %s8 = inlined_call_operand.vmem [shape: f32[1,128], index: 8, kind: input, shape index: {}]
  %s9 = inlined_call_operand.hbm [shape: bf16[128,256], index: 9, kind: input, shape index: {}]
  %s10 = inlined_call_operand.vmem [shape: f32[1,256], index: 10, kind: input, shape index: {}]
  %s11 = inlined_call_operand.hbm [shape: bf16[256,128], index: 11, kind: input, shape index: {}]
  %s12 = inlined_call_operand.vmem [shape: f32[1,128], index: 12, kind: input, shape index: {}]
  %s13 = inlined_call_operand.hbm [shape: f32[2,256], index: 13, kind: output, shape index: {}]
  %s14 = sld [smem:[#allocation0]]
  $region105: #{tpu_custom_call.1} parent=0
    _
  %s16 = ssub.s32 1, %s14
  %s17 = scalar_select 0, %s16, %s14
  $region1: #{tpu_custom_call.1} parent=0
    #allocation2 [shape = 'u8[65536]{0}', space=vmem, size = 0x10000, scoped, tag = 'input window, operand 0']
    #allocation3 [shape = 's32[2]{0}', space=sflag, size = 0x8, scoped, tag = 'scoped memory for tpu_custom_call.1']
    #allocation4 [shape = 's32[2]{0}', space=sflag, size = 0x8, scoped, tag = 'scoped memory for tpu_custom_call.1']
    #allocation5 [shape = 'u8[65536]{0}', space=vmem, size = 0x10000, scoped, tag = 'input window, operand 3, single buffered']
    #allocation6 [shape = 's32[1]{0}', space=sflag, size = 0x4, scoped, tag = 'scoped memory for tpu_custom_call.1']
    #allocation7 [shape = 'u8[65536]{0}', space=vmem, size = 0x10000, scoped, tag = 'input window, operand 5, single buffered']
    #allocation8 [shape = 'u8[65536]{0}', space=vmem, size = 0x10000, scoped, tag = 'input window, operand 9, single buffered']
    #allocation9 [shape = 's32[1]{0}', space=sflag, size = 0x4, scoped, tag = 'scoped memory for tpu_custom_call.1']
    #allocation10 [shape = 'u8[65536]{0}', space=vmem, size = 0x10000, scoped, tag = 'input window, operand 11, single buffered']
    #allocation11 [shape = 'u8[2048]{0}', space=vmem, size = 0x800, scoped, tag = 'output window, operand 0']
    %18 = vsyncpa [#allocation3], 0
    %s19 = scalar_lea.sflag [#allocation3], 1
    %20 = vsyncpa %s19, 0
    %21 = vsyncpa [#allocation6], 0
    %22 = vsyncpa [#allocation9], 0
    %23 = vsyncpa [#allocation4], 0
    %s24 = scalar_lea.sflag [#allocation4], 1
    %25 = vsyncpa %s24, 0
    loop: start=0, step=1, limit=4
    $region2: #{tpu_custom_call.1} parent=1 // loop_pre_header
      _
    $region3: #{tpu_custom_call.1} parent=1 // loop_header
      %s27 = sphi 0, %s31
      %p28 = scmp.ge.s32.totalorder %s27, 4
      %s37 = sphi 0, %s39
      %s40 = sphi 0, %s37
      %s41 = sphi 0, %s40
      %s57 = sphi 0, %s41
      %s61 = sphi 0, %s61
      %s63 = sphi 0, %s61
      %s64 = sphi 0, %s63
      %s78 = sphi 0, %s64
      %s82 = sphi 0, %s82
      %s84 = sphi 0, %s82
      %s85 = sphi 0, %s84
      %s99 = sphi 0, %s85
      %s103 = sphi 0, %s103
      %s105 = sphi 0, %s103
      %s106 = sphi 0, %s105
      %s120 = sphi 0, %s106
      %s124 = sphi 0, %s124
      %s126 = sphi 0, %s124
      %s127 = sphi 0, %s126
      %s141 = sphi 0, %s127
      %s145 = sphi 0, %s145
      %s147 = sphi 0, %s145
      %s148 = sphi 0, %s147
      %s162 = sphi 0, %s148
      %s166 = sphi 0, %s166
      %s168 = sphi 0, %s166
      %s169 = sphi 0, %s168
      %s183 = sphi 0, %s169
      %s187 = sphi 0, %s187
      %s189 = sphi 0, %s187
      %s190 = sphi 0, %s189
      %s204 = sphi 0, %s190
      %s208 = sphi 0, %s208
      %s210 = sphi 0, %s208
      %s211 = sphi 0, %s210
      %s225 = sphi 0, %s211
      %s229 = sphi 0, %s229
      %s231 = sphi 0, %s229
      %s232 = sphi 0, %s231
      %s246 = sphi 0, %s232
      %s250 = sphi 0, %s250
      %s252 = sphi 0, %s250
      %s253 = sphi 0, %s252
      %s267 = sphi 0, %s253
      %s271 = sphi 0, %s271
      %s273 = sphi 0, %s271
      %s274 = sphi 0, %s273
      %s288 = sphi 0, %s274
      %s292 = sphi 0, %s292
      %s294 = sphi 0, %s292
      %s295 = sphi 0, %s294
      %s309 = sphi 0, %s295
      %s315 = sphi 0, %s317
      %s318 = sphi 0, %s315
      %s319 = sphi 0, %s318
      %s335 = sphi 0, %s319
    $region4: #{tpu_custom_call.1} parent=1 // loop_header_branch
      %30 = sbr.rel (%p28) target = $region8
    $region5: #{tpu_custom_call.1} parent=1 // loop_body
      %s32 = ssub.s32 %s27, 1
      %s33 = ssub.s32 %s27, 2
      %s34 = sadd.s32 %s27, 1
      %s35 = ssub.s32 %s27, %s34
      %p36 = scmp.eq.s32.totalorder %s35, 0
      %s38 = sadd.s32 %s37, 1
      %s39 = scalar_select %p36, %s37, %s38
      %p42 = pneg %p36
      %p43 = scmp.eq.s32.totalorder %s27, 1
      %p44 = por %p42, %p43
      %p45 = scmp.ne.s32.totalorder %s37, %s40
      %p46 = scmp.eq.s32.totalorder %s27, 0
      %p47 = por %p45, %p46
      %p48 = scmp.ne.s32.totalorder %s37, %s40
      %p49 = scmp.eq.s32.totalorder %s32, 1
      %p50 = por %p48, %p49
      %p51 = scmp.ne.s32.totalorder %s40, %s41
      %p52 = scmp.eq.s32.totalorder %s32, 0
      %p53 = por %p51, %p52
      %p54 = scmp.ne.s32.totalorder %s40, %s41
      %p55 = scmp.eq.s32.totalorder %s33, 1
      %p56 = por %p54, %p55
      %p58 = scmp.ne.s32.totalorder %s41, %s57
      %p59 = scmp.eq.s32.totalorder %s33, 0
      %p60 = por %p58, %p59
      %s62 = sadd.s32 %s61, 1
      %p65 = scmp.eq.s32.totalorder %s27, 1
      %p66 = scmp.ne.s32.totalorder %s61, %s63
      %p67 = scmp.eq.s32.totalorder %s27, 0
      %p68 = por %p66, %p67
      %p69 = scmp.ne.s32.totalorder %s61, %s63
      %p70 = scmp.eq.s32.totalorder %s32, 1
      %p71 = por %p69, %p70
      %p72 = scmp.ne.s32.totalorder %s63, %s64
      %p73 = scmp.eq.s32.totalorder %s32, 0
      %p74 = por %p72, %p73
      %p75 = scmp.ne.s32.totalorder %s63, %s64
      %p76 = scmp.eq.s32.totalorder %s33, 1
      %p77 = por %p75, %p76
      %p79 = scmp.ne.s32.totalorder %s64, %s78
      %p80 = scmp.eq.s32.totalorder %s33, 0
      %p81 = por %p79, %p80
      %s83 = sadd.s32 %s82, 1
      %p86 = scmp.eq.s32.totalorder %s27, 1
      %p87 = scmp.ne.s32.totalorder %s82, %s84
      %p88 = scmp.eq.s32.totalorder %s27, 0
      %p89 = por %p87, %p88
      %p90 = scmp.ne.s32.totalorder %s82, %s84
      %p91 = scmp.eq.s32.totalorder %s32, 1
      %p92 = por %p90, %p91
      %p93 = scmp.ne.s32.totalorder %s84, %s85
      %p94 = scmp.eq.s32.totalorder %s32, 0
      %p95 = por %p93, %p94
      %p96 = scmp.ne.s32.totalorder %s84, %s85
      %p97 = scmp.eq.s32.totalorder %s33, 1
      %p98 = por %p96, %p97
      %p100 = scmp.ne.s32.totalorder %s85, %s99
      %p101 = scmp.eq.s32.totalorder %s33, 0
      %p102 = por %p100, %p101
      %s104 = sadd.s32 %s103, 1
      %p107 = scmp.eq.s32.totalorder %s27, 1
      %p108 = scmp.ne.s32.totalorder %s103, %s105
      %p109 = scmp.eq.s32.totalorder %s27, 0
      %p110 = por %p108, %p109
      %p111 = scmp.ne.s32.totalorder %s103, %s105
      %p112 = scmp.eq.s32.totalorder %s32, 1
      %p113 = por %p111, %p112
      %p114 = scmp.ne.s32.totalorder %s105, %s106
      %p115 = scmp.eq.s32.totalorder %s32, 0
      %p116 = por %p114, %p115
      %p117 = scmp.ne.s32.totalorder %s105, %s106
      %p118 = scmp.eq.s32.totalorder %s33, 1
      %p119 = por %p117, %p118
      %p121 = scmp.ne.s32.totalorder %s106, %s120
      %p122 = scmp.eq.s32.totalorder %s33, 0
      %p123 = por %p121, %p122
      %s125 = sadd.s32 %s124, 1
      %p128 = scmp.eq.s32.totalorder %s27, 1
      %p129 = scmp.ne.s32.totalorder %s124, %s126
      %p130 = scmp.eq.s32.totalorder %s27, 0
      %p131 = por %p129, %p130
      %p132 = scmp.ne.s32.totalorder %s124, %s126
      %p133 = scmp.eq.s32.totalorder %s32, 1
      %p134 = por %p132, %p133
      %p135 = scmp.ne.s32.totalorder %s126, %s127
      %p136 = scmp.eq.s32.totalorder %s32, 0
      %p137 = por %p135, %p136
      %p138 = scmp.ne.s32.totalorder %s126, %s127
      %p139 = scmp.eq.s32.totalorder %s33, 1
      %p140 = por %p138, %p139
      %p142 = scmp.ne.s32.totalorder %s127, %s141
      %p143 = scmp.eq.s32.totalorder %s33, 0
      %p144 = por %p142, %p143
      %s146 = sadd.s32 %s145, 1
      %p149 = scmp.eq.s32.totalorder %s27, 1
      %p150 = scmp.ne.s32.totalorder %s145, %s147
      %p151 = scmp.eq.s32.totalorder %s27, 0
      %p152 = por %p150, %p151
      %p153 = scmp.ne.s32.totalorder %s145, %s147
      %p154 = scmp.eq.s32.totalorder %s32, 1
      %p155 = por %p153, %p154
      %p156 = scmp.ne.s32.totalorder %s147, %s148
      %p157 = scmp.eq.s32.totalorder %s32, 0
      %p158 = por %p156, %p157
      %p159 = scmp.ne.s32.totalorder %s147, %s148
      %p160 = scmp.eq.s32.totalorder %s33, 1
      %p161 = por %p159, %p160
      %p163 = scmp.ne.s32.totalorder %s148, %s162
      %p164 = scmp.eq.s32.totalorder %s33, 0
      %p165 = por %p163, %p164
      %s167 = sadd.s32 %s166, 1
      %p170 = scmp.eq.s32.totalorder %s27, 1
      %p171 = scmp.ne.s32.totalorder %s166, %s168
      %p172 = scmp.eq.s32.totalorder %s27, 0
      %p173 = por %p171, %p172
      %p174 = scmp.ne.s32.totalorder %s166, %s168
      %p175 = scmp.eq.s32.totalorder %s32, 1
      %p176 = por %p174, %p175
      %p177 = scmp.ne.s32.totalorder %s168, %s169
      %p178 = scmp.eq.s32.totalorder %s32, 0
      %p179 = por %p177, %p178
      %p180 = scmp.ne.s32.totalorder %s168, %s169
      %p181 = scmp.eq.s32.totalorder %s33, 1
      %p182 = por %p180, %p181
      %p184 = scmp.ne.s32.totalorder %s169, %s183
      %p185 = scmp.eq.s32.totalorder %s33, 0
      %p186 = por %p184, %p185
      %s188 = sadd.s32 %s187, 1
      %p191 = scmp.eq.s32.totalorder %s27, 1
      %p192 = scmp.ne.s32.totalorder %s187, %s189
      %p193 = scmp.eq.s32.totalorder %s27, 0
      %p194 = por %p192, %p193
      %p195 = scmp.ne.s32.totalorder %s187, %s189
      %p196 = scmp.eq.s32.totalorder %s32, 1
      %p197 = por %p195, %p196
      %p198 = scmp.ne.s32.totalorder %s189, %s190
      %p199 = scmp.eq.s32.totalorder %s32, 0
      %p200 = por %p198, %p199
      %p201 = scmp.ne.s32.totalorder %s189, %s190
      %p202 = scmp.eq.s32.totalorder %s33, 1
      %p203 = por %p201, %p202
      %p205 = scmp.ne.s32.totalorder %s190, %s204
      %p206 = scmp.eq.s32.totalorder %s33, 0
      %p207 = por %p205, %p206
      %s209 = sadd.s32 %s208, 1
      %p212 = scmp.eq.s32.totalorder %s27, 1
      %p213 = scmp.ne.s32.totalorder %s208, %s210
      %p214 = scmp.eq.s32.totalorder %s27, 0
      %p215 = por %p213, %p214
      %p216 = scmp.ne.s32.totalorder %s208, %s210
      %p217 = scmp.eq.s32.totalorder %s32, 1
      %p218 = por %p216, %p217
      %p219 = scmp.ne.s32.totalorder %s210, %s211
      %p220 = scmp.eq.s32.totalorder %s32, 0
      %p221 = por %p219, %p220
      %p222 = scmp.ne.s32.totalorder %s210, %s211
      %p223 = scmp.eq.s32.totalorder %s33, 1
      %p224 = por %p222, %p223
      %p226 = scmp.ne.s32.totalorder %s211, %s225
      %p227 = scmp.eq.s32.totalorder %s33, 0
      %p228 = por %p226, %p227
      %s230 = sadd.s32 %s229, 1
      %p233 = scmp.eq.s32.totalorder %s27, 1
      %p234 = scmp.ne.s32.totalorder %s229, %s231
      %p235 = scmp.eq.s32.totalorder %s27, 0
      %p236 = por %p234, %p235
      %p237 = scmp.ne.s32.totalorder %s229, %s231
      %p238 = scmp.eq.s32.totalorder %s32, 1
      %p239 = por %p237, %p238
      %p240 = scmp.ne.s32.totalorder %s231, %s232
      %p241 = scmp.eq.s32.totalorder %s32, 0
      %p242 = por %p240, %p241
      %p243 = scmp.ne.s32.totalorder %s231, %s232
      %p244 = scmp.eq.s32.totalorder %s33, 1
      %p245 = por %p243, %p244
      %p247 = scmp.ne.s32.totalorder %s232, %s246
      %p248 = scmp.eq.s32.totalorder %s33, 0
      %p249 = por %p247, %p248
      %s251 = sadd.s32 %s250, 1
      %p254 = scmp.eq.s32.totalorder %s27, 1
      %p255 = scmp.ne.s32.totalorder %s250, %s252
      %p256 = scmp.eq.s32.totalorder %s27, 0
      %p257 = por %p255, %p256
      %p258 = scmp.ne.s32.totalorder %s250, %s252
      %p259 = scmp.eq.s32.totalorder %s32, 1
      %p260 = por %p258, %p259
      %p261 = scmp.ne.s32.totalorder %s252, %s253
      %p262 = scmp.eq.s32.totalorder %s32, 0
      %p263 = por %p261, %p262
      %p264 = scmp.ne.s32.totalorder %s252, %s253
      %p265 = scmp.eq.s32.totalorder %s33, 1
      %p266 = por %p264, %p265
      %p268 = scmp.ne.s32.totalorder %s253, %s267
      %p269 = scmp.eq.s32.totalorder %s33, 0
      %p270 = por %p268, %p269
      %s272 = sadd.s32 %s271, 1
      %p275 = scmp.eq.s32.totalorder %s27, 1
      %p276 = scmp.ne.s32.totalorder %s271, %s273
      %p277 = scmp.eq.s32.totalorder %s27, 0
      %p278 = por %p276, %p277
      %p279 = scmp.ne.s32.totalorder %s271, %s273
      %p280 = scmp.eq.s32.totalorder %s32, 1
      %p281 = por %p279, %p280
      %p282 = scmp.ne.s32.totalorder %s273, %s274
      %p283 = scmp.eq.s32.totalorder %s32, 0
      %p284 = por %p282, %p283
      %p285 = scmp.ne.s32.totalorder %s273, %s274
      %p286 = scmp.eq.s32.totalorder %s33, 1
      %p287 = por %p285, %p286
      %p289 = scmp.ne.s32.totalorder %s274, %s288
      %p290 = scmp.eq.s32.totalorder %s33, 0
      %p291 = por %p289, %p290
      %s293 = sadd.s32 %s292, 1
      %p296 = scmp.eq.s32.totalorder %s27, 1
      %p297 = scmp.ne.s32.totalorder %s292, %s294
      %p298 = scmp.eq.s32.totalorder %s27, 0
      %p299 = por %p297, %p298
      %p300 = scmp.ne.s32.totalorder %s292, %s294
      %p301 = scmp.eq.s32.totalorder %s32, 1
      %p302 = por %p300, %p301
      %p303 = scmp.ne.s32.totalorder %s294, %s295
      %p304 = scmp.eq.s32.totalorder %s32, 0
      %p305 = por %p303, %p304
      %p306 = scmp.ne.s32.totalorder %s294, %s295
      %p307 = scmp.eq.s32.totalorder %s33, 1
      %p308 = por %p306, %p307
      %p310 = scmp.ne.s32.totalorder %s295, %s309
      %p311 = scmp.eq.s32.totalorder %s33, 0
      %p312 = por %p310, %p311
      %s313 = ssub.s32 %s27, %s34
      %p314 = scmp.eq.s32.totalorder %s313, 0
      %s316 = sadd.s32 %s315, 1
      %s317 = scalar_select %p314, %s315, %s316
      %p320 = pneg %p314
      %p321 = scmp.eq.s32.totalorder %s27, 1
      %p322 = por %p320, %p321
      %p323 = scmp.ne.s32.totalorder %s315, %s318
      %p324 = scmp.eq.s32.totalorder %s27, 0
      %p325 = por %p323, %p324
      %p326 = scmp.ne.s32.totalorder %s315, %s318
      %p327 = scmp.eq.s32.totalorder %s32, 1
      %p328 = por %p326, %p327
      %p329 = scmp.ne.s32.totalorder %s318, %s319
      %p330 = scmp.eq.s32.totalorder %s32, 0
      %p331 = por %p329, %p330
      %p332 = scmp.ne.s32.totalorder %s318, %s319
      %p333 = scmp.eq.s32.totalorder %s33, 1
      %p334 = por %p332, %p333
      %p336 = scmp.ne.s32.totalorder %s319, %s335
      %p337 = scmp.eq.s32.totalorder %s33, 0
      %p338 = por %p336, %p337
      %p339 = scmp.le.s32.totalorder 1, %s27
      %p340 = scmp.lt.s32.totalorder %s27, 3
      %p341 = pnand %p339, %p340
      %p342 = pneg %p341
      // Predicated region
      $region9: #{tpu_custom_call.1} parent=5 // pred_check
        _
      $region10: #{tpu_custom_call.1} parent=5 // pred_check_branch
        %344 = sbr.rel (%p341) target = $region12
      $region11: #{tpu_custom_call.1} parent=5 // pred_region
        %s345 = ssub.s32 %s27, 1
        // Predicated region
        $region13: #{tpu_custom_call.1} parent=11 // pred_check
          %p346 = pneg %p74
        $region14: #{tpu_custom_call.1} parent=11 // pred_check_branch
          %348 = sbr.rel (%p346) target = $region16
        $region15: #{tpu_custom_call.1} parent=11 // pred_region
          _
        $region16: #{tpu_custom_call.1} parent=11 // pred_fallthru
          _
        // Predicated region
        $region17: #{tpu_custom_call.1} parent=11 // pred_check
          %p349 = pneg %p95
        $region18: #{tpu_custom_call.1} parent=11 // pred_check_branch
          %351 = sbr.rel (%p349) target = $region20
        $region19: #{tpu_custom_call.1} parent=11 // pred_region
          _
        $region20: #{tpu_custom_call.1} parent=11 // pred_fallthru
          _
        // Predicated region
        $region21: #{tpu_custom_call.1} parent=11 // pred_check
          %p352 = pneg %p116
        $region22: #{tpu_custom_call.1} parent=11 // pred_check_branch
          %354 = sbr.rel (%p352) target = $region24
        $region23: #{tpu_custom_call.1} parent=11 // pred_region
          %s356 = ssub.s32 2048, 2048
          %357 = vsyncadd [#allocation6], %s356
          %s358 = sshll.u32 [#allocation5], 4
          %s359 = int_to_ptr.vmem [resolvable:$true] %s358
          %364 = dma.hbm_to_vmem [thread:$0]  %s3, 2048, %s359, [#allocation6], 128, 128, 8
        $region24: #{tpu_custom_call.1} parent=11 // pred_fallthru
          _
        // Predicated region
        $region25: #{tpu_custom_call.1} parent=11 // pred_check
          %p365 = pneg %p137
        $region26: #{tpu_custom_call.1} parent=11 // pred_check_branch
          %367 = sbr.rel (%p365) target = $region28
        $region27: #{tpu_custom_call.1} parent=11 // pred_region
          _
        $region28: #{tpu_custom_call.1} parent=11 // pred_fallthru
          _
        // Predicated region
        $region29: #{tpu_custom_call.1} parent=11 // pred_check
          %p368 = pneg %p158
        $region30: #{tpu_custom_call.1} parent=11 // pred_check_branch
          %370 = sbr.rel (%p368) target = $region32
        $region31: #{tpu_custom_call.1} parent=11 // pred_region
          %s372 = ssub.s32 2048, 2048
          %373 = vsyncadd [#allocation6], %s372
          %s374 = sshll.u32 [#allocation7], 4
          %s375 = int_to_ptr.vmem [resolvable:$true] %s374
          %380 = dma.hbm_to_vmem [thread:$0]  %s5, 2048, %s375, [#allocation6], 64, 64, 4
        $region32: #{tpu_custom_call.1} parent=11 // pred_fallthru
          _
        // Predicated region
        $region33: #{tpu_custom_call.1} parent=11 // pred_check
          %p381 = pneg %p179
        $region34: #{tpu_custom_call.1} parent=11 // pred_check_branch
          %383 = sbr.rel (%p381) target = $region36
        $region35: #{tpu_custom_call.1} parent=11 // pred_region
          _
        $region36: #{tpu_custom_call.1} parent=11 // pred_fallthru
          _
        // Predicated region
        $region37: #{tpu_custom_call.1} parent=11 // pred_check
          %p384 = pneg %p200
        $region38: #{tpu_custom_call.1} parent=11 // pred_check_branch
          %386 = sbr.rel (%p384) target = $region40
        $region39: #{tpu_custom_call.1} parent=11 // pred_region
          _
        $region40: #{tpu_custom_call.1} parent=11 // pred_fallthru
          _
        // Predicated region
        $region41: #{tpu_custom_call.1} parent=11 // pred_check
          %p387 = pneg %p221
        $region42: #{tpu_custom_call.1} parent=11 // pred_check_branch
          %389 = sbr.rel (%p387) target = $region44
        $region43: #{tpu_custom_call.1} parent=11 // pred_region
          _
        $region44: #{tpu_custom_call.1} parent=11 // pred_fallthru
          _
        // Predicated region
        $region45: #{tpu_custom_call.1} parent=11 // pred_check
          %p390 = pneg %p242
        $region46: #{tpu_custom_call.1} parent=11 // pred_check_branch
          %392 = sbr.rel (%p390) target = $region48
        $region47: #{tpu_custom_call.1} parent=11 // pred_region
          %s394 = ssub.s32 2048, 2048
          %395 = vsyncadd [#allocation9], %s394
          %s396 = sshll.u32 [#allocation8], 4
          %s397 = int_to_ptr.vmem [resolvable:$true] %s396
          %402 = dma.hbm_to_vmem [thread:$0]  %s9, 2048, %s397, [#allocation9], 128, 128, 8
        $region48: #{tpu_custom_call.1} parent=11 // pred_fallthru
          _
        // Predicated region
        $region49: #{tpu_custom_call.1} parent=11 // pred_check
          %p403 = pneg %p263
        $region50: #{tpu_custom_call.1} parent=11 // pred_check_branch
          %405 = sbr.rel (%p403) target = $region52
        $region51: #{tpu_custom_call.1} parent=11 // pred_region
          _
        $region52: #{tpu_custom_call.1} parent=11 // pred_fallthru
          _
        // Predicated region
        $region53: #{tpu_custom_call.1} parent=11 // pred_check
          %p406 = pneg %p284
        $region54: #{tpu_custom_call.1} parent=11 // pred_check_branch
          %408 = sbr.rel (%p406) target = $region56
        $region55: #{tpu_custom_call.1} parent=11 // pred_region
          %s410 = ssub.s32 2048, 2048
          %411 = vsyncadd [#allocation9], %s410
          %s412 = sshll.u32 [#allocation10], 4
          %s413 = int_to_ptr.vmem [resolvable:$true] %s412
          %418 = dma.hbm_to_vmem [thread:$0]  %s11, 2048, %s413, [#allocation9], 64, 64, 4
        $region56: #{tpu_custom_call.1} parent=11 // pred_fallthru
          _
        // Predicated region
        $region57: #{tpu_custom_call.1} parent=11 // pred_check
          %p419 = pneg %p305
        $region58: #{tpu_custom_call.1} parent=11 // pred_check_branch
          %421 = sbr.rel (%p419) target = $region60
        $region59: #{tpu_custom_call.1} parent=11 // pred_region
          _
        $region60: #{tpu_custom_call.1} parent=11 // pred_fallthru
          _
      $region12: #{tpu_custom_call.1} parent=5 // pred_fallthru
        _
      %p422 = scmp.lt.s32.totalorder %s27, 2
      // Predicated region
      $region61: #{tpu_custom_call.1} parent=5 // pred_check
        %p423 = pneg %p422
      $region62: #{tpu_custom_call.1} parent=5 // pred_check_branch
        %425 = sbr.rel (%p423) target = $region64
      $region63: #{tpu_custom_call.1} parent=5 // pred_region
        // Predicated region
        $region65: #{tpu_custom_call.1} parent=63 // pred_check
          %p426 = pneg %p47
        $region66: #{tpu_custom_call.1} parent=63 // pred_check_branch
          %428 = sbr.rel (%p426) target = $region68
        $region67: #{tpu_custom_call.1} parent=63 // pred_region
          %s429 = sand.u32 %s37, 1
          %s430 = scalar_lea.sflag [#allocation3], %s429
          %s431 = sand.u32 %s37, 1
          %s432 = smul.addr %s431, 64
          %s433 = scalar_lea.vmem [#allocation2], %s432
          %s434 = smul.u32 16, %s27
          %s436 = ssub.s32 1024, 1024
          %437 = vsyncadd %s430, %s436
          %s438 = smul.addr %s434, 64
          %s439 = scalar_lea.hbm %s0, %s438
          %s440 = sshll.u32 %s433, 4
          %s441 = int_to_ptr.vmem [resolvable:$true] %s440
          %446 = dma.hbm_to_vmem [thread:$0]  %s439, 1024, %s441, %s430, 64, 64, 4
        $region68: #{tpu_custom_call.1} parent=63 // pred_fallthru
          _
      $region64: #{tpu_custom_call.1} parent=5 // pred_fallthru
        _
      %p447 = scmp.le.s32.totalorder 1, %s27
      %p448 = scmp.lt.s32.totalorder %s27, 3
      %p449 = pnand %p447, %p448
      %p450 = pneg %p449
      // Predicated region
      $region69: #{tpu_custom_call.1} parent=5 // pred_check
        _
      $region70: #{tpu_custom_call.1} parent=5 // pred_check_branch
        %452 = sbr.rel (%p449) target = $region72
      $region71: #{tpu_custom_call.1} parent=5 // pred_region
        %s453 = ssub.s32 %s27, 1
        %s454 = sand.u32 %s40, 1
        %s455 = scalar_lea.sflag [#allocation3], %s454
        %s456 = sand.u32 %s40, 1
        %s457 = smul.addr %s456, 64
        %s458 = scalar_lea.vmem [#allocation2], %s457
        // Predicated region
        $region73: #{tpu_custom_call.1} parent=71 // pred_check
          %p459 = pneg %p53
        $region74: #{tpu_custom_call.1} parent=71 // pred_check_branch
          %461 = sbr.rel (%p459) target = $region76
        $region75: #{tpu_custom_call.1} parent=71 // pred_region
          %462 = dma.done %s455, 1024
        $region76: #{tpu_custom_call.1} parent=71 // pred_fallthru
          _
        // Predicated region
        $region77: #{tpu_custom_call.1} parent=71 // pred_check
          %p463 = pneg %p116
        $region78: #{tpu_custom_call.1} parent=71 // pred_check_branch
          %465 = sbr.rel (%p463) target = $region80
        $region79: #{tpu_custom_call.1} parent=71 // pred_region
          %466 = dma.done [#allocation6], 2048
        $region80: #{tpu_custom_call.1} parent=71 // pred_fallthru
          _
        // Predicated region
        $region81: #{tpu_custom_call.1} parent=71 // pred_check
          %p467 = pneg %p158
        $region82: #{tpu_custom_call.1} parent=71 // pred_check_branch
          %469 = sbr.rel (%p467) target = $region84
        $region83: #{tpu_custom_call.1} parent=71 // pred_region
          %470 = dma.done [#allocation6], 2048
        $region84: #{tpu_custom_call.1} parent=71 // pred_fallthru
          _
        // Predicated region
        $region85: #{tpu_custom_call.1} parent=71 // pred_check
          %p471 = pneg %p242
        $region86: #{tpu_custom_call.1} parent=71 // pred_check_branch
          %473 = sbr.rel (%p471) target = $region88
        $region87: #{tpu_custom_call.1} parent=71 // pred_region
          %474 = dma.done [#allocation9], 2048
        $region88: #{tpu_custom_call.1} parent=71 // pred_fallthru
          _
        // Predicated region
        $region89: #{tpu_custom_call.1} parent=71 // pred_check
          %p475 = pneg %p284
        $region90: #{tpu_custom_call.1} parent=71 // pred_check_branch
          %477 = sbr.rel (%p475) target = $region92
        $region91: #{tpu_custom_call.1} parent=71 // pred_region
          %478 = dma.done [#allocation9], 2048
        $region92: #{tpu_custom_call.1} parent=71 // pred_fallthru
          _
        %s479 = sand.u32 %s40, 1
        %s480 = scalar_lea.sflag [#allocation3], %s479
        %s481 = sand.u32 %s40, 1
        %s482 = smul.addr %s481, 64
        %s483 = scalar_lea.vmem [#allocation2], %s482
        %p484 = pneg %p53
        %p485 = pneg %p50
        %p486 = pneg %p74
        %p487 = pneg %p71
        %p488 = pneg %p95
        %p489 = pneg %p92
        %p490 = pneg %p116
        %p491 = pneg %p113
        %p492 = pneg %p137
        %p493 = pneg %p134
        %p494 = pneg %p158
        %p495 = pneg %p155
        %p496 = pneg %p179
        %p497 = pneg %p176
        %p498 = pneg %p200
        %p499 = pneg %p197
        %p500 = pneg %p221
        %p501 = pneg %p218
        %p502 = pneg %p242
        %p503 = pneg %p239
        %p504 = pneg %p263
        %p505 = pneg %p260
        %p506 = pneg %p284
        %p507 = pneg %p281
        %p508 = pneg %p305
        %p509 = pneg %p302
        %p510 = pneg %p331
        %p511 = pneg %p328
        %s512 = sand.u32 %s318, 1
        %s513 = scalar_lea.sflag [#allocation4], %s512
        %s514 = sand.u32 %s318, 1
        %s515 = smul.addr %s514, 2
        %s516 = scalar_lea.vmem [#allocation11], %s515
        %s517 = smul.u32 16, %s32
        %v519 = vld [vmem:[%s458] sm:$0xf]
        %v520 = vld [vmem:[%s458 + $0x4] sm:$0xf]
        %v521 = vld [vmem:[%s458 + $0x8] sm:$0xf]
        %v522 = vld [vmem:[%s458 + $0xc] sm:$0xf]
        %v523 = vld [vmem:[%s458 + $0x10] sm:$0xf]
        %v524 = vld [vmem:[%s458 + $0x14] sm:$0xf]
        %v525 = vld [vmem:[%s458 + $0x18] sm:$0xf]
        %v526 = vld [vmem:[%s458 + $0x1c] sm:$0xf]
        %v527 = vld [vmem:[%s458 + $0x20] sm:$0xf]
        %v528 = vld [vmem:[%s458 + $0x24] sm:$0xf]
        %v529 = vld [vmem:[%s458 + $0x28] sm:$0xf]
        %v530 = vld [vmem:[%s458 + $0x2c] sm:$0xf]
        %v531 = vld [vmem:[%s458 + $0x30] sm:$0xf]
        %v532 = vld [vmem:[%s458 + $0x34] sm:$0xf]
        %v533 = vld [vmem:[%s458 + $0x38] sm:$0xf]
        %v534 = vld [vmem:[%s458 + $0x3c] sm:$0xf]
        %v535 = vunpack.c.l.bf16 %v519
        %v536 = vunpack.c.l.bf16 %v520
        %v537 = vunpack.c.l.bf16 %v521
        %v538 = vunpack.c.l.bf16 %v522
        %v539 = vunpack.c.l.bf16 %v523
        %v540 = vunpack.c.l.bf16 %v524
        %v541 = vunpack.c.l.bf16 %v525
        %v542 = vunpack.c.l.bf16 %v526
        %v543 = vunpack.c.l.bf16 %v527
        %v544 = vunpack.c.l.bf16 %v528
        %v545 = vunpack.c.l.bf16 %v529
        %v546 = vunpack.c.l.bf16 %v530
        %v547 = vunpack.c.l.bf16 %v531
        %v548 = vunpack.c.l.bf16 %v532
        %v549 = vunpack.c.l.bf16 %v533
        %v550 = vunpack.c.l.bf16 %v534
        %v551 = vld [vmem:[%s1] sm:$0x1]
        %v552 = vld [vmem:[%s2] sm:$0x1]
        %553 = vadd.xlane.f32.xlu0 %v535
        %v554 = vpop.xlane.xlu0 %553
        %555 = vadd.xlane.f32.xlu0 %v536
        %v556 = vpop.xlane.xlu0 %555
        %557 = vadd.xlane.f32.xlu0 %v537
        %v558 = vpop.xlane.xlu0 %557
        %559 = vadd.xlane.f32.xlu0 %v538
        %v560 = vpop.xlane.xlu0 %559
        %561 = vadd.xlane.f32.xlu0 %v539
        %v562 = vpop.xlane.xlu0 %561
        %563 = vadd.xlane.f32.xlu0 %v540
        %v564 = vpop.xlane.xlu0 %563
        %565 = vadd.xlane.f32.xlu0 %v541
        %v566 = vpop.xlane.xlu0 %565
        %567 = vadd.xlane.f32.xlu0 %v542
        %v568 = vpop.xlane.xlu0 %567
        %569 = vadd.xlane.f32.xlu0 %v543
        %v570 = vpop.xlane.xlu0 %569
        %571 = vadd.xlane.f32.xlu0 %v544
        %v572 = vpop.xlane.xlu0 %571
        %573 = vadd.xlane.f32.xlu0 %v545
        %v574 = vpop.xlane.xlu0 %573
        %575 = vadd.xlane.f32.xlu0 %v546
        %v576 = vpop.xlane.xlu0 %575
        %577 = vadd.xlane.f32.xlu0 %v547
        %v578 = vpop.xlane.xlu0 %577
        %579 = vadd.xlane.f32.xlu0 %v548
        %v580 = vpop.xlane.xlu0 %579
        %581 = vadd.xlane.f32.xlu0 %v549
        %v582 = vpop.xlane.xlu0 %581
        %583 = vadd.xlane.f32.xlu0 %v550
        %v584 = vpop.xlane.xlu0 %583
        %v585 = vrcp.pop 128.0
        %v586 = vmul.f32 %v554, %v585
        %v587 = vmul.f32 %v556, %v585
        %v588 = vmul.f32 %v558, %v585
        %v589 = vmul.f32 %v560, %v585
        %v590 = vmul.f32 %v562, %v585
        %v591 = vmul.f32 %v564, %v585
        %v592 = vmul.f32 %v566, %v585
        %v593 = vmul.f32 %v568, %v585
        %v594 = vmul.f32 %v570, %v585
        %v595 = vmul.f32 %v572, %v585
        %v596 = vmul.f32 %v574, %v585
        %v597 = vmul.f32 %v576, %v585
        %v598 = vmul.f32 %v578, %v585
        %v599 = vmul.f32 %v580, %v585
        %v600 = vmul.f32 %v582, %v585
        %v601 = vmul.f32 %v584, %v585
        %v602 = vsub.f32 %v535, %v586
        %v603 = vsub.f32 %v536, %v587
        %v604 = vsub.f32 %v537, %v588
        %v605 = vsub.f32 %v538, %v589
        %v606 = vsub.f32 %v539, %v590
        %v607 = vsub.f32 %v540, %v591
        %v608 = vsub.f32 %v541, %v592
        %v609 = vsub.f32 %v542, %v593
        %v610 = vsub.f32 %v543, %v594
        %v611 = vsub.f32 %v544, %v595
        %v612 = vsub.f32 %v545, %v596
        %v613 = vsub.f32 %v546, %v597
        %v614 = vsub.f32 %v547, %v598
        %v615 = vsub.f32 %v548, %v599
        %v616 = vsub.f32 %v549, %v600
        %v617 = vsub.f32 %v550, %v601
        %v618 = vmul.f32 %v602, %v602
        %v619 = vmul.f32 %v603, %v603
        %v620 = vmul.f32 %v604, %v604
        %v621 = vmul.f32 %v605, %v605
        %v622 = vmul.f32 %v606, %v606
        %v623 = vmul.f32 %v607, %v607
        %v624 = vmul.f32 %v608, %v608
        %v625 = vmul.f32 %v609, %v609
        %v626 = vmul.f32 %v610, %v610
        %v627 = vmul.f32 %v611, %v611
        %v628 = vmul.f32 %v612, %v612
        %v629 = vmul.f32 %v613, %v613
        %v630 = vmul.f32 %v614, %v614
        %v631 = vmul.f32 %v615, %v615
        %v632 = vmul.f32 %v616, %v616
        %v633 = vmul.f32 %v617, %v617
        %634 = vadd.xlane.f32.xlu0 %v618
        %v635 = vpop.xlane.xlu0 %634
        %636 = vadd.xlane.f32.xlu0 %v619
        %v637 = vpop.xlane.xlu0 %636
        %638 = vadd.xlane.f32.xlu0 %v620
        %v639 = vpop.xlane.xlu0 %638
        %640 = vadd.xlane.f32.xlu0 %v621
        %v641 = vpop.xlane.xlu0 %640
        %642 = vadd.xlane.f32.xlu0 %v622
        %v643 = vpop.xlane.xlu0 %642
        %644 = vadd.xlane.f32.xlu0 %v623
        %v645 = vpop.xlane.xlu0 %644
        %646 = vadd.xlane.f32.xlu0 %v624
        %v647 = vpop.xlane.xlu0 %646
        %648 = vadd.xlane.f32.xlu0 %v625
        %v649 = vpop.xlane.xlu0 %648
        %650 = vadd.xlane.f32.xlu0 %v626
        %v651 = vpop.xlane.xlu0 %650
        %652 = vadd.xlane.f32.xlu0 %v627
        %v653 = vpop.xlane.xlu0 %652
        %654 = vadd.xlane.f32.xlu0 %v628
        %v655 = vpop.xlane.xlu0 %654
        %656 = vadd.xlane.f32.xlu0 %v629
        %v657 = vpop.xlane.xlu0 %656
        %658 = vadd.xlane.f32.xlu0 %v630
        %v659 = vpop.xlane.xlu0 %658
        %660 = vadd.xlane.f32.xlu0 %v631
        %v661 = vpop.xlane.xlu0 %660
        %662 = vadd.xlane.f32.xlu0 %v632
        %v663 = vpop.xlane.xlu0 %662
        %664 = vadd.xlane.f32.xlu0 %v633
        %v665 = vpop.xlane.xlu0 %664
        %v666 = vmul.f32 %v635, %v585
        %v667 = vmul.f32 %v637, %v585
        %v668 = vmul.f32 %v639, %v585
        %v669 = vmul.f32 %v641, %v585
        %v670 = vmul.f32 %v643, %v585
        %v671 = vmul.f32 %v645, %v585
        %v672 = vmul.f32 %v647, %v585
        %v673 = vmul.f32 %v649, %v585
        %v674 = vmul.f32 %v651, %v585
        %v675 = vmul.f32 %v653, %v585
        %v676 = vmul.f32 %v655, %v585
        %v677 = vmul.f32 %v657, %v585
        %v678 = vmul.f32 %v659, %v585
        %v679 = vmul.f32 %v661, %v585
        %v680 = vmul.f32 %v663, %v585
        %v681 = vmul.f32 %v665, %v585
        %v682 = vadd.f32 %v666, 1e-06
        %v683 = vadd.f32 %v667, 1e-06
        %v684 = vadd.f32 %v668, 1e-06
        %v685 = vadd.f32 %v669, 1e-06
        %v686 = vadd.f32 %v670, 1e-06
        %v687 = vadd.f32 %v671, 1e-06
        %v688 = vadd.f32 %v672, 1e-06
        %v689 = vadd.f32 %v673, 1e-06
        %v690 = vadd.f32 %v674, 1e-06
        %v691 = vadd.f32 %v675, 1e-06
        %v692 = vadd.f32 %v676, 1e-06
        %v693 = vadd.f32 %v677, 1e-06
        %v694 = vadd.f32 %v678, 1e-06
        %v695 = vadd.f32 %v679, 1e-06
        %v696 = vadd.f32 %v680, 1e-06
        %v697 = vadd.f32 %v681, 1e-06
        %v698 = vrsqrt.pop %v682
        %v699 = vrsqrt.pop %v683
        %v700 = vrsqrt.pop %v684
        %v701 = vrsqrt.pop %v685
        %v702 = vrsqrt.pop %v686
        %v703 = vrsqrt.pop %v687
        %v704 = vrsqrt.pop %v688
        %v705 = vrsqrt.pop %v689
        %v706 = vrsqrt.pop %v690
        %v707 = vrsqrt.pop %v691
        %v708 = vrsqrt.pop %v692
        %v709 = vrsqrt.pop %v693
        %v710 = vrsqrt.pop %v694
        %v711 = vrsqrt.pop %v695
        %v712 = vrsqrt.pop %v696
        %v713 = vrsqrt.pop %v697
        %v714 = vmul.f32 %v602, %v698
        %v715 = vmul.f32 %v603, %v699
        %v716 = vmul.f32 %v604, %v700
        %v717 = vmul.f32 %v605, %v701
        %v718 = vmul.f32 %v606, %v702
        %v719 = vmul.f32 %v607, %v703
        %v720 = vmul.f32 %v608, %v704
        %v721 = vmul.f32 %v609, %v705
        %v722 = vmul.f32 %v610, %v706
        %v723 = vmul.f32 %v611, %v707
        %v724 = vmul.f32 %v612, %v708
        %v725 = vmul.f32 %v613, %v709
        %v726 = vmul.f32 %v614, %v710
        %v727 = vmul.f32 %v615, %v711
        %v728 = vmul.f32 %v616, %v712
        %v729 = vmul.f32 %v617, %v713
        %v731 = vlaneseq
        %v732 = vshrl.u32 %v731, 7
        %v733 = vsub.s32 0, %v732
        %v734 = vrot.slane %v551, %v733
        %v736 = vmul.f32 %v714, %v734
        %v737 = vmul.f32 %v715, %v734
        %v738 = vmul.f32 %v716, %v734
        %v739 = vmul.f32 %v717, %v734
        %v740 = vmul.f32 %v718, %v734
        %v741 = vmul.f32 %v719, %v734
        %v742 = vmul.f32 %v720, %v734
        %v743 = vmul.f32 %v721, %v734
        %v744 = vmul.f32 %v722, %v734
        %v745 = vmul.f32 %v723, %v734
        %v746 = vmul.f32 %v724, %v734
        %v747 = vmul.f32 %v725, %v734
        %v748 = vmul.f32 %v726, %v734
        %v749 = vmul.f32 %v727, %v734
        %v750 = vmul.f32 %v728, %v734
        %v751 = vmul.f32 %v729, %v734
        %v753 = vlaneseq
        %v754 = vshrl.u32 %v753, 7
        %v755 = vsub.s32 0, %v754
        %v756 = vrot.slane %v552, %v755
        %v758 = vadd.f32 %v736, %v756
        %v759 = vadd.f32 %v737, %v756
        %v760 = vadd.f32 %v738, %v756
        %v761 = vadd.f32 %v739, %v756
        %v762 = vadd.f32 %v740, %v756
        %v763 = vadd.f32 %v741, %v756
        %v764 = vadd.f32 %v742, %v756
        %v765 = vadd.f32 %v743, %v756
        %v766 = vadd.f32 %v744, %v756
        %v767 = vadd.f32 %v745, %v756
        %v768 = vadd.f32 %v746, %v756
        %v769 = vadd.f32 %v747, %v756
        %v770 = vadd.f32 %v748, %v756
        %v771 = vadd.f32 %v749, %v756
        %v772 = vadd.f32 %v750, %v756
        %v773 = vadd.f32 %v751, %v756
        %v774 = vpack.c.bf16 %v759, %v758
        %v775 = vpack.c.bf16 %v761, %v760
        %v776 = vpack.c.bf16 %v763, %v762
        %v777 = vpack.c.bf16 %v765, %v764
        %v778 = vpack.c.bf16 %v767, %v766
        %v779 = vpack.c.bf16 %v769, %v768
        %v780 = vpack.c.bf16 %v771, %v770
        %v781 = vpack.c.bf16 %v773, %v772
        %v782 = vld [vmem:[#allocation5] sm:$0xff]
        %v783 = vld [vmem:[#allocation5 + $0x8] sm:$0xff]
        %v784 = vld [vmem:[#allocation5 + $0x10] sm:$0xff]
        %v785 = vld [vmem:[#allocation5 + $0x18] sm:$0xff]
        %v786 = vld [vmem:[#allocation5 + $0x20] sm:$0xff]
        %v787 = vld [vmem:[#allocation5 + $0x28] sm:$0xff]
        %v788 = vld [vmem:[#allocation5 + $0x30] sm:$0xff]
        %v789 = vld [vmem:[#allocation5 + $0x38] sm:$0xff]
        %v790 = vld [vmem:[#allocation5 + $0x40] sm:$0xff]
        %v791 = vld [vmem:[#allocation5 + $0x48] sm:$0xff]
        %v792 = vld [vmem:[#allocation5 + $0x50] sm:$0xff]
        %v793 = vld [vmem:[#allocation5 + $0x58] sm:$0xff]
        %v794 = vld [vmem:[#allocation5 + $0x60] sm:$0xff]
        %v795 = vld [vmem:[#allocation5 + $0x68] sm:$0xff]
        %v796 = vld [vmem:[#allocation5 + $0x70] sm:$0xff]
        %v797 = vld [vmem:[#allocation5 + $0x78] sm:$0xff]
        %v798 = vld [vmem:[%s4] sm:$0x3]
        %v800 = vlaneseq
        %v801 = vshrl.u32 %v800, 7
        %v802 = vsub.s32 0, %v801
        %v803 = vrot.slane %v798, %v802
        %v804 = vlaneseq
        %v805 = vshrl.u32 %v804, 7
        %v806 = vsub.s32 1, %v805
        %v807 = vrot.slane %v798, %v806
        %v826 = vunpack.c.l.b16 %v782
        %v827 = vunpack.c.h.b16 %v782
        %v828 = vunpack.c.l.b16 %v783
        %v829 = vunpack.c.h.b16 %v783
        %v830 = vunpack.c.l.b16 %v784
        %v831 = vunpack.c.h.b16 %v784
        %v832 = vunpack.c.l.b16 %v785
        %v833 = vunpack.c.h.b16 %v785
        %v834 = vunpack.c.l.b16 %v786
        %v835 = vunpack.c.h.b16 %v786
        %v836 = vunpack.c.l.b16 %v787
        %v837 = vunpack.c.h.b16 %v787
        %v838 = vunpack.c.l.b16 %v788
        %v839 = vunpack.c.h.b16 %v788
        %v840 = vunpack.c.l.b16 %v789
        %v841 = vunpack.c.h.b16 %v789
        %v842 = vunpack.c.l.b16 %v790
        %v843 = vunpack.c.h.b16 %v790
        %v844 = vunpack.c.l.b16 %v791
        %v845 = vunpack.c.h.b16 %v791
        %v846 = vunpack.c.l.b16 %v792
        %v847 = vunpack.c.h.b16 %v792
        %v848 = vunpack.c.l.b16 %v793
        %v849 = vunpack.c.h.b16 %v793
        %v850 = vunpack.c.l.b16 %v794
        %v851 = vunpack.c.h.b16 %v794
        %v852 = vunpack.c.l.b16 %v795
        %v853 = vunpack.c.h.b16 %v795
        %v854 = vunpack.c.l.b16 %v796
        %v855 = vunpack.c.h.b16 %v796
        %v856 = vunpack.c.l.b16 %v797
        %v857 = vunpack.c.h.b16 %v797
        %v858 = vpack.c.b16 %v828, %v826
        %v859 = vpack.c.b16 %v829, %v827
        %v860 = vpack.c.b16 %v832, %v830
        %v861 = vpack.c.b16 %v833, %v831
        %v862 = vpack.c.b16 %v836, %v834
        %v863 = vpack.c.b16 %v837, %v835
        %v864 = vpack.c.b16 %v840, %v838
        %v865 = vpack.c.b16 %v841, %v839
        %v866 = vpack.c.b16 %v844, %v842
        %v867 = vpack.c.b16 %v845, %v843
        %v868 = vpack.c.b16 %v848, %v846
        %v869 = vpack.c.b16 %v849, %v847
        %v870 = vpack.c.b16 %v852, %v850
        %v871 = vpack.c.b16 %v853, %v851
        %v872 = vpack.c.b16 %v856, %v854
        %v873 = vpack.c.b16 %v857, %v855
        %890 = vmatprep.subr.bf16.mxu0 %v859
        %891 = vmatpush1.bf16.msra.mxu0 %v858
        %892 = vmatprep.subr.bf16.mxu0 %v861
        %893 = vmatpush1.bf16.msra.mxu0 %v860
        %894 = vmatprep.subr.bf16.mxu0 %v863
        %895 = vmatpush1.bf16.msra.mxu0 %v862
        %896 = vmatprep.subr.bf16.mxu0 %v865
        %897 = vmatpush1.bf16.msra.mxu0 %v864
        %898 = vmatprep.subr.bf16.mxu0 %v867
        %899 = vmatpush1.bf16.msra.mxu0 %v866
        %900 = vmatprep.subr.bf16.mxu0 %v869
        %901 = vmatpush1.bf16.msra.mxu0 %v868
        %902 = vmatprep.subr.bf16.mxu0 %v871
        %903 = vmatpush1.bf16.msra.mxu0 %v870
        %904 = vmatprep.subr.bf16.mxu0 %v873
        %905 = vmatpush1.bf16.msra.mxu0 %v872
        %906 = vmatprep.subr.bf16.mxu0 0
        %907 = vmatpush1.bf16.msra.mxu0 0
        %908 = vmatprep.subr.bf16.mxu0 0
        %909 = vmatpush1.bf16.msra.mxu0 0
        %910 = vmatprep.subr.bf16.mxu0 0
        %911 = vmatpush1.bf16.msra.mxu0 0
        %912 = vmatprep.subr.bf16.mxu0 0
        %913 = vmatpush1.bf16.msra.mxu0 0
        %914 = vmatprep.subr.bf16.mxu0 0
        %915 = vmatpush1.bf16.msra.mxu0 0
        %916 = vmatprep.subr.bf16.mxu0 0
        %917 = vmatpush1.bf16.msra.mxu0 0
        %918 = vmatprep.subr.bf16.mxu0 0
        %919 = vmatpush1.bf16.msra.mxu0 0
        %920 = vmatprep.subr.bf16.mxu0 0
        %921 = vmatpush1.bf16.msra.mxu0 0
        %922 = vmatprep.mubr.bf16.mxu0 0
        %923 = vmatmul.mubr.bf16.gmra.mrb[0].mxu0 %v774
        %v924 = vpop.f32.mrb[0].mxu0
        %v925 = vadd.f32 %v803, %v924
        %v926 = vpop.f32.mrb[0].mxu0
        %v927 = vadd.f32 %v807, %v926
        %v928 = vpop.f32.mrb[0].mxu0
        %v929 = vadd.f32 %v803, %v928
        %v930 = vpop.f32.mrb[0].mxu0
        %v931 = vadd.f32 %v807, %v930
        %932 = vmatprep.mubr.bf16.mxu0 0
        %933 = vmatmul.mubr.bf16.gmra.mrb[0].mxu0 %v775
        %v934 = vpop.f32.mrb[0].mxu0
        %v935 = vadd.f32 %v803, %v934
        %v936 = vpop.f32.mrb[0].mxu0
        %v937 = vadd.f32 %v807, %v936
        %v938 = vpop.f32.mrb[0].mxu0
        %v939 = vadd.f32 %v803, %v938
        %v940 = vpop.f32.mrb[0].mxu0
        %v941 = vadd.f32 %v807, %v940
        %942 = vmatprep.mubr.bf16.mxu0 0
        %943 = vmatmul.mubr.bf16.gmra.mrb[0].mxu0 %v776
        %v944 = vpop.f32.mrb[0].mxu0
        %v945 = vadd.f32 %v803, %v944
        %v946 = vpop.f32.mrb[0].mxu0
        %v947 = vadd.f32 %v807, %v946
        %v948 = vpop.f32.mrb[0].mxu0
        %v949 = vadd.f32 %v803, %v948
        %v950 = vpop.f32.mrb[0].mxu0
        %v951 = vadd.f32 %v807, %v950
        %952 = vmatprep.mubr.bf16.mxu0 0
        %953 = vmatmul.mubr.bf16.gmra.mrb[0].mxu0 %v777
        %v954 = vpop.f32.mrb[0].mxu0
        %v955 = vadd.f32 %v803, %v954
        %v956 = vpop.f32.mrb[0].mxu0
        %v957 = vadd.f32 %v807, %v956
        %v958 = vpop.f32.mrb[0].mxu0
        %v959 = vadd.f32 %v803, %v958
        %v960 = vpop.f32.mrb[0].mxu0
        %v961 = vadd.f32 %v807, %v960
        %962 = vmatprep.mubr.bf16.mxu0 0
        %963 = vmatmul.mubr.bf16.gmra.mrb[0].mxu0 %v778
        %v964 = vpop.f32.mrb[0].mxu0
        %v965 = vadd.f32 %v803, %v964
        %v966 = vpop.f32.mrb[0].mxu0
        %v967 = vadd.f32 %v807, %v966
        %v968 = vpop.f32.mrb[0].mxu0
        %v969 = vadd.f32 %v803, %v968
        %v970 = vpop.f32.mrb[0].mxu0
        %v971 = vadd.f32 %v807, %v970
        %972 = vmatprep.mubr.bf16.mxu0 0
        %973 = vmatmul.mubr.bf16.gmra.mrb[0].mxu0 %v779
        %v974 = vpop.f32.mrb[0].mxu0
        %v975 = vadd.f32 %v803, %v974
        %v976 = vpop.f32.mrb[0].mxu0
        %v977 = vadd.f32 %v807, %v976
        %v978 = vpop.f32.mrb[0].mxu0
        %v979 = vadd.f32 %v803, %v978
        %v980 = vpop.f32.mrb[0].mxu0
        %v981 = vadd.f32 %v807, %v980
        %982 = vmatprep.mubr.bf16.mxu0 0
        %983 = vmatmul.mubr.bf16.gmra.mrb[0].mxu0 %v780
        %v984 = vpop.f32.mrb[0].mxu0
        %v985 = vadd.f32 %v803, %v984
        %v986 = vpop.f32.mrb[0].mxu0
        %v987 = vadd.f32 %v807, %v986
        %v988 = vpop.f32.mrb[0].mxu0
        %v989 = vadd.f32 %v803, %v988
        %v990 = vpop.f32.mrb[0].mxu0
        %v991 = vadd.f32 %v807, %v990
        %992 = vmatprep.mubr.bf16.mxu0 0
        %993 = vmatmul.mubr.bf16.gmra.mrb[0].mxu0 %v781
        %v994 = vpop.f32.mrb[0].mxu0
        %v995 = vadd.f32 %v803, %v994
        %v996 = vpop.f32.mrb[0].mxu0
        %v997 = vadd.f32 %v807, %v996
        %v998 = vpop.f32.mrb[0].mxu0
        %v999 = vadd.f32 %v803, %v998
        %v1000 = vpop.f32.mrb[0].mxu0
        %v1001 = vadd.f32 %v807, %v1000
        %1002 = vdwg.mxu0
        %v1003 = vmul.f32 %v925, 0.5
        %v1004 = vmul.f32 %v927, 0.5
        %v1005 = vmul.f32 %v929, 0.5
        %v1006 = vmul.f32 %v931, 0.5
        %v1007 = vmul.f32 %v935, 0.5
        %v1008 = vmul.f32 %v937, 0.5
        %v1009 = vmul.f32 %v939, 0.5
        %v1010 = vmul.f32 %v941, 0.5
        %v1011 = vmul.f32 %v945, 0.5
        %v1012 = vmul.f32 %v947, 0.5
        %v1013 = vmul.f32 %v949, 0.5
        %v1014 = vmul.f32 %v951, 0.5
        %v1015 = vmul.f32 %v955, 0.5
        %v1016 = vmul.f32 %v957, 0.5
        %v1017 = vmul.f32 %v959, 0.5
        %v1018 = vmul.f32 %v961, 0.5
        %v1019 = vmul.f32 %v965, 0.5
        %v1020 = vmul.f32 %v967, 0.5
        %v1021 = vmul.f32 %v969, 0.5
        %v1022 = vmul.f32 %v971, 0.5
        %v1023 = vmul.f32 %v975, 0.5
        %v1024 = vmul.f32 %v977, 0.5
        %v1025 = vmul.f32 %v979, 0.5
        %v1026 = vmul.f32 %v981, 0.5
        %v1027 = vmul.f32 %v985, 0.5
        %v1028 = vmul.f32 %v987, 0.5
        %v1029 = vmul.f32 %v989, 0.5
        %v1030 = vmul.f32 %v991, 0.5
        %v1031 = vmul.f32 %v995, 0.5
        %v1032 = vmul.f32 %v997, 0.5
        %v1033 = vmul.f32 %v999, 0.5
        %v1034 = vmul.f32 %v1001, 0.5
        %v1035 = vmul.f32 %v925, 0.044715
        %v1036 = vmul.f32 %v927, 0.044715
        %v1037 = vmul.f32 %v929, 0.044715
        %v1038 = vmul.f32 %v931, 0.044715
        %v1039 = vmul.f32 %v935, 0.044715
        %v1040 = vmul.f32 %v937, 0.044715
        %v1041 = vmul.f32 %v939, 0.044715
        %v1042 = vmul.f32 %v941, 0.044715
        %v1043 = vmul.f32 %v945, 0.044715
        %v1044 = vmul.f32 %v947, 0.044715
        %v1045 = vmul.f32 %v949, 0.044715
        %v1046 = vmul.f32 %v951, 0.044715
        %v1047 = vmul.f32 %v955, 0.044715
        %v1048 = vmul.f32 %v957, 0.044715
        %v1049 = vmul.f32 %v959, 0.044715
        %v1050 = vmul.f32 %v961, 0.044715
        %v1051 = vmul.f32 %v965, 0.044715
        %v1052 = vmul.f32 %v967, 0.044715
        %v1053 = vmul.f32 %v969, 0.044715
        %v1054 = vmul.f32 %v971, 0.044715
        %v1055 = vmul.f32 %v975, 0.044715
        %v1056 = vmul.f32 %v977, 0.044715
        %v1057 = vmul.f32 %v979, 0.044715
        %v1058 = vmul.f32 %v981, 0.044715
        %v1059 = vmul.f32 %v985, 0.044715
        %v1060 = vmul.f32 %v987, 0.044715
        %v1061 = vmul.f32 %v989, 0.044715
        %v1062 = vmul.f32 %v991, 0.044715
        %v1063 = vmul.f32 %v995, 0.044715
        %v1064 = vmul.f32 %v997, 0.044715
        %v1065 = vmul.f32 %v999, 0.044715
        %v1066 = vmul.f32 %v1001, 0.044715
        %v1067 = vmul.f32 %v1035, %v925
        %v1068 = vmul.f32 %v1036, %v927
        %v1069 = vmul.f32 %v1037, %v929
        %v1070 = vmul.f32 %v1038, %v931
        %v1071 = vmul.f32 %v1039, %v935
        %v1072 = vmul.f32 %v1040, %v937
        %v1073 = vmul.f32 %v1041, %v939
        %v1074 = vmul.f32 %v1042, %v941
        %v1075 = vmul.f32 %v1043, %v945
        %v1076 = vmul.f32 %v1044, %v947
        %v1077 = vmul.f32 %v1045, %v949
        %v1078 = vmul.f32 %v1046, %v951
        %v1079 = vmul.f32 %v1047, %v955
        %v1080 = vmul.f32 %v1048, %v957
        %v1081 = vmul.f32 %v1049, %v959
        %v1082 = vmul.f32 %v1050, %v961
        %v1083 = vmul.f32 %v1051, %v965
        %v1084 = vmul.f32 %v1052, %v967
        %v1085 = vmul.f32 %v1053, %v969
        %v1086 = vmul.f32 %v1054, %v971
        %v1087 = vmul.f32 %v1055, %v975
        %v1088 = vmul.f32 %v1056, %v977
        %v1089 = vmul.f32 %v1057, %v979
        %v1090 = vmul.f32 %v1058, %v981
        %v1091 = vmul.f32 %v1059, %v985
        %v1092 = vmul.f32 %v1060, %v987
        %v1093 = vmul.f32 %v1061, %v989
        %v1094 = vmul.f32 %v1062, %v991
        %v1095 = vmul.f32 %v1063, %v995
        %v1096 = vmul.f32 %v1064, %v997
        %v1097 = vmul.f32 %v1065, %v999
        %v1098 = vmul.f32 %v1066, %v1001
        %v1099 = vmul.f32 %v1067, %v925
        %v1100 = vmul.f32 %v1068, %v927
        %v1101 = vmul.f32 %v1069, %v929
        %v1102 = vmul.f32 %v1070, %v931
        %v1103 = vmul.f32 %v1071, %v935
        %v1104 = vmul.f32 %v1072, %v937
        %v1105 = vmul.f32 %v1073, %v939
        %v1106 = vmul.f32 %v1074, %v941
        %v1107 = vmul.f32 %v1075, %v945
        %v1108 = vmul.f32 %v1076, %v947
        %v1109 = vmul.f32 %v1077, %v949
        %v1110 = vmul.f32 %v1078, %v951
        %v1111 = vmul.f32 %v1079, %v955
        %v1112 = vmul.f32 %v1080, %v957
        %v1113 = vmul.f32 %v1081, %v959
        %v1114 = vmul.f32 %v1082, %v961
        %v1115 = vmul.f32 %v1083, %v965
        %v1116 = vmul.f32 %v1084, %v967
        %v1117 = vmul.f32 %v1085, %v969
        %v1118 = vmul.f32 %v1086, %v971
        %v1119 = vmul.f32 %v1087, %v975
        %v1120 = vmul.f32 %v1088, %v977
        %v1121 = vmul.f32 %v1089, %v979
        %v1122 = vmul.f32 %v1090, %v981
        %v1123 = vmul.f32 %v1091, %v985
        %v1124 = vmul.f32 %v1092, %v987
        %v1125 = vmul.f32 %v1093, %v989
        %v1126 = vmul.f32 %v1094, %v991
        %v1127 = vmul.f32 %v1095, %v995
        %v1128 = vmul.f32 %v1096, %v997
        %v1129 = vmul.f32 %v1097, %v999
        %v1130 = vmul.f32 %v1098, %v1001
        %v1131 = vadd.f32 %v925, %v1099
        %v1132 = vadd.f32 %v927, %v1100
        %v1133 = vadd.f32 %v929, %v1101
        %v1134 = vadd.f32 %v931, %v1102
        %v1135 = vadd.f32 %v935, %v1103
        %v1136 = vadd.f32 %v937, %v1104
        %v1137 = vadd.f32 %v939, %v1105
        %v1138 = vadd.f32 %v941, %v1106
        %v1139 = vadd.f32 %v945, %v1107
        %v1140 = vadd.f32 %v947, %v1108
        %v1141 = vadd.f32 %v949, %v1109
        %v1142 = vadd.f32 %v951, %v1110
        %v1143 = vadd.f32 %v955, %v1111
        %v1144 = vadd.f32 %v957, %v1112
        %v1145 = vadd.f32 %v959, %v1113
        %v1146 = vadd.f32 %v961, %v1114
        %v1147 = vadd.f32 %v965, %v1115
        %v1148 = vadd.f32 %v967, %v1116
        %v1149 = vadd.f32 %v969, %v1117
        %v1150 = vadd.f32 %v971, %v1118
        %v1151 = vadd.f32 %v975, %v1119
        %v1152 = vadd.f32 %v977, %v1120
        %v1153 = vadd.f32 %v979, %v1121
        %v1154 = vadd.f32 %v981, %v1122
        %v1155 = vadd.f32 %v985, %v1123
        %v1156 = vadd.f32 %v987, %v1124
        %v1157 = vadd.f32 %v989, %v1125
        %v1158 = vadd.f32 %v991, %v1126
        %v1159 = vadd.f32 %v995, %v1127
        %v1160 = vadd.f32 %v997, %v1128
        %v1161 = vadd.f32 %v999, %v1129
        %v1162 = vadd.f32 %v1001, %v1130
        %v1163 = vmul.f32 %v1131, 0.7978846
        %v1164 = vmul.f32 %v1132, 0.7978846
        %v1165 = vmul.f32 %v1133, 0.7978846
        %v1166 = vmul.f32 %v1134, 0.7978846
        %v1167 = vmul.f32 %v1135, 0.7978846
        %v1168 = vmul.f32 %v1136, 0.7978846
        %v1169 = vmul.f32 %v1137, 0.7978846
        %v1170 = vmul.f32 %v1138, 0.7978846
        %v1171 = vmul.f32 %v1139, 0.7978846
        %v1172 = vmul.f32 %v1140, 0.7978846
        %v1173 = vmul.f32 %v1141, 0.7978846
        %v1174 = vmul.f32 %v1142, 0.7978846
        %v1175 = vmul.f32 %v1143, 0.7978846
        %v1176 = vmul.f32 %v1144, 0.7978846
        %v1177 = vmul.f32 %v1145, 0.7978846
        %v1178 = vmul.f32 %v1146, 0.7978846
        %v1179 = vmul.f32 %v1147, 0.7978846
        %v1180 = vmul.f32 %v1148, 0.7978846
        %v1181 = vmul.f32 %v1149, 0.7978846
        %v1182 = vmul.f32 %v1150, 0.7978846
        %v1183 = vmul.f32 %v1151, 0.7978846
        %v1184 = vmul.f32 %v1152, 0.7978846
        %v1185 = vmul.f32 %v1153, 0.7978846
        %v1186 = vmul.f32 %v1154, 0.7978846
        %v1187 = vmul.f32 %v1155, 0.7978846
        %v1188 = vmul.f32 %v1156, 0.7978846
        %v1189 = vmul.f32 %v1157, 0.7978846
        %v1190 = vmul.f32 %v1158, 0.7978846
        %v1191 = vmul.f32 %v1159, 0.7978846
        %v1192 = vmul.f32 %v1160, 0.7978846
        %v1193 = vmul.f32 %v1161, 0.7978846
        %v1194 = vmul.f32 %v1162, 0.7978846
        %v1195 = vtanh.pop %v1163
        %v1196 = vtanh.pop %v1164
        %v1197 = vtanh.pop %v1165
        %v1198 = vtanh.pop %v1166
        %v1199 = vtanh.pop %v1167
        %v1200 = vtanh.pop %v1168
        %v1201 = vtanh.pop %v1169
        %v1202 = vtanh.pop %v1170
        %v1203 = vtanh.pop %v1171
        %v1204 = vtanh.pop %v1172
        %v1205 = vtanh.pop %v1173
        %v1206 = vtanh.pop %v1174
        %v1207 = vtanh.pop %v1175
        %v1208 = vtanh.pop %v1176
        %v1209 = vtanh.pop %v1177
        %v1210 = vtanh.pop %v1178
        %v1211 = vtanh.pop %v1179
        %v1212 = vtanh.pop %v1180
        %v1213 = vtanh.pop %v1181
        %v1214 = vtanh.pop %v1182
        %v1215 = vtanh.pop %v1183
        %v1216 = vtanh.pop %v1184
        %v1217 = vtanh.pop %v1185
        %v1218 = vtanh.pop %v1186
        %v1219 = vtanh.pop %v1187
        %v1220 = vtanh.pop %v1188
        %v1221 = vtanh.pop %v1189
        %v1222 = vtanh.pop %v1190
        %v1223 = vtanh.pop %v1191
        %v1224 = vtanh.pop %v1192
        %v1225 = vtanh.pop %v1193
        %v1226 = vtanh.pop %v1194
        %v1227 = vadd.f32 %v1195, 1.0
        %v1228 = vadd.f32 %v1196, 1.0
        %v1229 = vadd.f32 %v1197, 1.0
        %v1230 = vadd.f32 %v1198, 1.0
        %v1231 = vadd.f32 %v1199, 1.0
        %v1232 = vadd.f32 %v1200, 1.0
        %v1233 = vadd.f32 %v1201, 1.0
        %v1234 = vadd.f32 %v1202, 1.0
        %v1235 = vadd.f32 %v1203, 1.0
        %v1236 = vadd.f32 %v1204, 1.0
        %v1237 = vadd.f32 %v1205, 1.0
        %v1238 = vadd.f32 %v1206, 1.0
        %v1239 = vadd.f32 %v1207, 1.0
        %v1240 = vadd.f32 %v1208, 1.0
        %v1241 = vadd.f32 %v1209, 1.0
        %v1242 = vadd.f32 %v1210, 1.0
        %v1243 = vadd.f32 %v1211, 1.0
        %v1244 = vadd.f32 %v1212, 1.0
        %v1245 = vadd.f32 %v1213, 1.0
        %v1246 = vadd.f32 %v1214, 1.0
        %v1247 = vadd.f32 %v1215, 1.0
        %v1248 = vadd.f32 %v1216, 1.0
        %v1249 = vadd.f32 %v1217, 1.0
        %v1250 = vadd.f32 %v1218, 1.0
        %v1251 = vadd.f32 %v1219, 1.0
        %v1252 = vadd.f32 %v1220, 1.0
        %v1253 = vadd.f32 %v1221, 1.0
        %v1254 = vadd.f32 %v1222, 1.0
        %v1255 = vadd.f32 %v1223, 1.0
        %v1256 = vadd.f32 %v1224, 1.0
        %v1257 = vadd.f32 %v1225, 1.0
        %v1258 = vadd.f32 %v1226, 1.0
        %v1259 = vmul.f32 %v1003, %v1227
        %v1260 = vmul.f32 %v1004, %v1228
        %v1261 = vmul.f32 %v1005, %v1229
        %v1262 = vmul.f32 %v1006, %v1230
        %v1263 = vmul.f32 %v1007, %v1231
        %v1264 = vmul.f32 %v1008, %v1232
        %v1265 = vmul.f32 %v1009, %v1233
        %v1266 = vmul.f32 %v1010, %v1234
        %v1267 = vmul.f32 %v1011, %v1235
        %v1268 = vmul.f32 %v1012, %v1236
        %v1269 = vmul.f32 %v1013, %v1237
        %v1270 = vmul.f32 %v1014, %v1238
        %v1271 = vmul.f32 %v1015, %v1239
        %v1272 = vmul.f32 %v1016, %v1240
        %v1273 = vmul.f32 %v1017, %v1241
        %v1274 = vmul.f32 %v1018, %v1242
        %v1275 = vmul.f32 %v1019, %v1243
        %v1276 = vmul.f32 %v1020, %v1244
        %v1277 = vmul.f32 %v1021, %v1245
        %v1278 = vmul.f32 %v1022, %v1246
        %v1279 = vmul.f32 %v1023, %v1247
        %v1280 = vmul.f32 %v1024, %v1248
        %v1281 = vmul.f32 %v1025, %v1249
        %v1282 = vmul.f32 %v1026, %v1250
        %v1283 = vmul.f32 %v1027, %v1251
        %v1284 = vmul.f32 %v1028, %v1252
        %v1285 = vmul.f32 %v1029, %v1253
        %v1286 = vmul.f32 %v1030, %v1254
        %v1287 = vmul.f32 %v1031, %v1255
        %v1288 = vmul.f32 %v1032, %v1256
        %v1289 = vmul.f32 %v1033, %v1257
        %v1290 = vmul.f32 %v1034, %v1258
        %v1291 = vpack.c.bf16 %v1261, %v1259
        %v1292 = vpack.c.bf16 %v1262, %v1260
        %v1293 = vpack.c.bf16 %v1265, %v1263
        %v1294 = vpack.c.bf16 %v1266, %v1264
        %v1295 = vpack.c.bf16 %v1269, %v1267
        %v1296 = vpack.c.bf16 %v1270, %v1268
        %v1297 = vpack.c.bf16 %v1273, %v1271
        %v1298 = vpack.c.bf16 %v1274, %v1272
        %v1299 = vpack.c.bf16 %v1277, %v1275
        %v1300 = vpack.c.bf16 %v1278, %v1276
        %v1301 = vpack.c.bf16 %v1281, %v1279
        %v1302 = vpack.c.bf16 %v1282, %v1280
        %v1303 = vpack.c.bf16 %v1285, %v1283
        %v1304 = vpack.c.bf16 %v1286, %v1284
        %v1305 = vpack.c.bf16 %v1289, %v1287
        %v1306 = vpack.c.bf16 %v1290, %v1288
        %v1307 = vld [vmem:[#allocation7] sm:$0xf]
        %v1308 = vld [vmem:[#allocation7 + $0x4] sm:$0xf]
        %v1309 = vld [vmem:[#allocation7 + $0x8] sm:$0xf]
        %v1310 = vld [vmem:[#allocation7 + $0xc] sm:$0xf]
        %v1311 = vld [vmem:[#allocation7 + $0x10] sm:$0xf]
        %v1312 = vld [vmem:[#allocation7 + $0x14] sm:$0xf]
        %v1313 = vld [vmem:[#allocation7 + $0x18] sm:$0xf]
        %v1314 = vld [vmem:[#allocation7 + $0x1c] sm:$0xf]
        %v1315 = vld [vmem:[#allocation7 + $0x20] sm:$0xf]
        %v1316 = vld [vmem:[#allocation7 + $0x24] sm:$0xf]
        %v1317 = vld [vmem:[#allocation7 + $0x28] sm:$0xf]
        %v1318 = vld [vmem:[#allocation7 + $0x2c] sm:$0xf]
        %v1319 = vld [vmem:[#allocation7 + $0x30] sm:$0xf]
        %v1320 = vld [vmem:[#allocation7 + $0x34] sm:$0xf]
        %v1321 = vld [vmem:[#allocation7 + $0x38] sm:$0xf]
        %v1322 = vld [vmem:[#allocation7 + $0x3c] sm:$0xf]
        %v1323 = vld [vmem:[#allocation7 + $0x40] sm:$0xf]
        %v1324 = vld [vmem:[#allocation7 + $0x44] sm:$0xf]
        %v1325 = vld [vmem:[#allocation7 + $0x48] sm:$0xf]
        %v1326 = vld [vmem:[#allocation7 + $0x4c] sm:$0xf]
        %v1327 = vld [vmem:[#allocation7 + $0x50] sm:$0xf]
        %v1328 = vld [vmem:[#allocation7 + $0x54] sm:$0xf]
        %v1329 = vld [vmem:[#allocation7 + $0x58] sm:$0xf]
        %v1330 = vld [vmem:[#allocation7 + $0x5c] sm:$0xf]
        %v1331 = vld [vmem:[#allocation7 + $0x60] sm:$0xf]
        %v1332 = vld [vmem:[#allocation7 + $0x64] sm:$0xf]
        %v1333 = vld [vmem:[#allocation7 + $0x68] sm:$0xf]
        %v1334 = vld [vmem:[#allocation7 + $0x6c] sm:$0xf]
        %v1335 = vld [vmem:[#allocation7 + $0x70] sm:$0xf]
        %v1336 = vld [vmem:[#allocation7 + $0x74] sm:$0xf]
        %v1337 = vld [vmem:[#allocation7 + $0x78] sm:$0xf]
        %v1338 = vld [vmem:[#allocation7 + $0x7c] sm:$0xf]
        %v1339 = vld [vmem:[%s6] sm:$0x1]
        %v1341 = vlaneseq
        %v1342 = vshrl.u32 %v1341, 7
        %v1343 = vsub.s32 0, %v1342
        %v1344 = vrot.slane %v1339, %v1343
        %v1378 = vunpack.c.l.b16 %v1307
        %v1379 = vunpack.c.l.b16 %v1308
        %v1380 = vunpack.c.l.b16 %v1309
        %v1381 = vunpack.c.l.b16 %v1310
        %v1382 = vunpack.c.l.b16 %v1311
        %v1383 = vunpack.c.l.b16 %v1312
        %v1384 = vunpack.c.l.b16 %v1313
        %v1385 = vunpack.c.l.b16 %v1314
        %v1386 = vunpack.c.l.b16 %v1315
        %v1387 = vunpack.c.l.b16 %v1316
        %v1388 = vunpack.c.l.b16 %v1317
        %v1389 = vunpack.c.l.b16 %v1318
        %v1390 = vunpack.c.l.b16 %v1319
        %v1391 = vunpack.c.l.b16 %v1320
        %v1392 = vunpack.c.l.b16 %v1321
        %v1393 = vunpack.c.l.b16 %v1322
        %v1394 = vunpack.c.l.b16 %v1323
        %v1395 = vunpack.c.l.b16 %v1324
        %v1396 = vunpack.c.l.b16 %v1325
        %v1397 = vunpack.c.l.b16 %v1326
        %v1398 = vunpack.c.l.b16 %v1327
        %v1399 = vunpack.c.l.b16 %v1328
        %v1400 = vunpack.c.l.b16 %v1329
        %v1401 = vunpack.c.l.b16 %v1330
        %v1402 = vunpack.c.l.b16 %v1331
        %v1403 = vunpack.c.l.b16 %v1332
        %v1404 = vunpack.c.l.b16 %v1333
        %v1405 = vunpack.c.l.b16 %v1334
        %v1406 = vunpack.c.l.b16 %v1335
        %v1407 = vunpack.c.l.b16 %v1336
        %v1408 = vunpack.c.l.b16 %v1337
        %v1409 = vunpack.c.l.b16 %v1338
        %v1410 = vpack.c.b16 %v1379, %v1378
        %v1411 = vpack.c.b16 %v1381, %v1380
        %v1412 = vpack.c.b16 %v1383, %v1382
        %v1413 = vpack.c.b16 %v1385, %v1384
        %v1414 = vpack.c.b16 %v1387, %v1386
        %v1415 = vpack.c.b16 %v1389, %v1388
        %v1416 = vpack.c.b16 %v1391, %v1390
        %v1417 = vpack.c.b16 %v1393, %v1392
        %v1418 = vpack.c.b16 %v1395, %v1394
        %v1419 = vpack.c.b16 %v1397, %v1396
        %v1420 = vpack.c.b16 %v1399, %v1398
        %v1421 = vpack.c.b16 %v1401, %v1400
        %v1422 = vpack.c.b16 %v1403, %v1402
        %v1423 = vpack.c.b16 %v1405, %v1404
        %v1424 = vpack.c.b16 %v1407, %v1406
        %v1425 = vpack.c.b16 %v1409, %v1408
        %1442 = vmatprep.subr.bf16.mxu0 0
        %1443 = vmatpush1.bf16.msra.mxu0 %v1410
        %1444 = vmatprep.subr.bf16.mxu0 0
        %1445 = vmatpush1.bf16.msra.mxu0 %v1411
        %1446 = vmatprep.subr.bf16.mxu0 0
        %1447 = vmatpush1.bf16.msra.mxu0 %v1412
        %1448 = vmatprep.subr.bf16.mxu0 0
        %1449 = vmatpush1.bf16.msra.mxu0 %v1413
        %1450 = vmatprep.subr.bf16.mxu0 0
        %1451 = vmatpush1.bf16.msra.mxu0 %v1414
        %1452 = vmatprep.subr.bf16.mxu0 0
        %1453 = vmatpush1.bf16.msra.mxu0 %v1415
        %1454 = vmatprep.subr.bf16.mxu0 0
        %1455 = vmatpush1.bf16.msra.mxu0 %v1416
        %1456 = vmatprep.subr.bf16.mxu0 0
        %1457 = vmatpush1.bf16.msra.mxu0 %v1417
        %1458 = vmatprep.subr.bf16.mxu0 0
        %1459 = vmatpush1.bf16.msra.mxu0 %v1418
        %1460 = vmatprep.subr.bf16.mxu0 0
        %1461 = vmatpush1.bf16.msra.mxu0 %v1419
        %1462 = vmatprep.subr.bf16.mxu0 0
        %1463 = vmatpush1.bf16.msra.mxu0 %v1420
        %1464 = vmatprep.subr.bf16.mxu0 0
        %1465 = vmatpush1.bf16.msra.mxu0 %v1421
        %1466 = vmatprep.subr.bf16.mxu0 0
        %1467 = vmatpush1.bf16.msra.mxu0 %v1422
        %1468 = vmatprep.subr.bf16.mxu0 0
        %1469 = vmatpush1.bf16.msra.mxu0 %v1423
        %1470 = vmatprep.subr.bf16.mxu0 0
        %1471 = vmatpush1.bf16.msra.mxu0 %v1424
        %1472 = vmatprep.subr.bf16.mxu0 0
        %1473 = vmatpush1.bf16.msra.mxu0 %v1425
        %1474 = vmatprep.mubr.bf16.mxu0 %v1292
        %1475 = vmatmul.mubr.bf16.gmra.mrb[0].mxu0 %v1291
        %v1476 = vpop.f32.mrb[0].mxu0
        %v1477 = vadd.f32 %v1344, %v1476
        %v1478 = vpop.f32.mrb[0].mxu0
        %v1479 = vpop.f32.mrb[0].mxu0
        %v1480 = vadd.f32 %v1344, %v1479
        %v1481 = vpop.f32.mrb[0].mxu0
        %1482 = vmatprep.mubr.bf16.mxu0 %v1294
        %1483 = vmatmul.mubr.bf16.gmra.mrb[0].mxu0 %v1293
        %v1484 = vpop.f32.mrb[0].mxu0
        %v1485 = vadd.f32 %v1344, %v1484
        %v1486 = vpop.f32.mrb[0].mxu0
        %v1487 = vpop.f32.mrb[0].mxu0
        %v1488 = vadd.f32 %v1344, %v1487
        %v1489 = vpop.f32.mrb[0].mxu0
        %1490 = vmatprep.mubr.bf16.mxu0 %v1296
        %1491 = vmatmul.mubr.bf16.gmra.mrb[0].mxu0 %v1295
        %v1492 = vpop.f32.mrb[0].mxu0
        %v1493 = vadd.f32 %v1344, %v1492
        %v1494 = vpop.f32.mrb[0].mxu0
        %v1495 = vpop.f32.mrb[0].mxu0
        %v1496 = vadd.f32 %v1344, %v1495
        %v1497 = vpop.f32.mrb[0].mxu0
        %1498 = vmatprep.mubr.bf16.mxu0 %v1298
        %1499 = vmatmul.mubr.bf16.gmra.mrb[0].mxu0 %v1297
        %v1500 = vpop.f32.mrb[0].mxu0
        %v1501 = vadd.f32 %v1344, %v1500
        %v1502 = vpop.f32.mrb[0].mxu0
        %v1503 = vpop.f32.mrb[0].mxu0
        %v1504 = vadd.f32 %v1344, %v1503
        %v1505 = vpop.f32.mrb[0].mxu0
        %1506 = vmatprep.mubr.bf16.mxu0 %v1300
        %1507 = vmatmul.mubr.bf16.gmra.mrb[0].mxu0 %v1299
        %v1508 = vpop.f32.mrb[0].mxu0
        %v1509 = vadd.f32 %v1344, %v1508
        %v1510 = vpop.f32.mrb[0].mxu0
        %v1511 = vpop.f32.mrb[0].mxu0
        %v1512 = vadd.f32 %v1344, %v1511
        %v1513 = vpop.f32.mrb[0].mxu0
        %1514 = vmatprep.mubr.bf16.mxu0 %v1302
        %1515 = vmatmul.mubr.bf16.gmra.mrb[0].mxu0 %v1301
        %v1516 = vpop.f32.mrb[0].mxu0
        %v1517 = vadd.f32 %v1344, %v1516
        %v1518 = vpop.f32.mrb[0].mxu0
        %v1519 = vpop.f32.mrb[0].mxu0
        %v1520 = vadd.f32 %v1344, %v1519
        %v1521 = vpop.f32.mrb[0].mxu0
        %1522 = vmatprep.mubr.bf16.mxu0 %v1304
        %1523 = vmatmul.mubr.bf16.gmra.mrb[0].mxu0 %v1303
        %v1524 = vpop.f32.mrb[0].mxu0
        %v1525 = vadd.f32 %v1344, %v1524
        %v1526 = vpop.f32.mrb[0].mxu0
        %v1527 = vpop.f32.mrb[0].mxu0
        %v1528 = vadd.f32 %v1344, %v1527
        %v1529 = vpop.f32.mrb[0].mxu0
        %1530 = vmatprep.mubr.bf16.mxu0 %v1306
        %1531 = vmatmul.mubr.bf16.gmra.mrb[0].mxu0 %v1305
        %v1532 = vpop.f32.mrb[0].mxu0
        %v1533 = vadd.f32 %v1344, %v1532
        %v1534 = vpop.f32.mrb[0].mxu0
        %v1535 = vpop.f32.mrb[0].mxu0
        %v1536 = vadd.f32 %v1344, %v1535
        %v1537 = vpop.f32.mrb[0].mxu0
        %1538 = vdwg.mxu0
        %v1539 = vld [vmem:[%s7] sm:$0x1]
        %v1540 = vld [vmem:[%s8] sm:$0x1]
        %1541 = vadd.xlane.f32.xlu0 %v1477
        %v1542 = vpop.xlane.xlu0 %1541
        %1543 = vadd.xlane.f32.xlu0 %v1480
        %v1544 = vpop.xlane.xlu0 %1543
        %1545 = vadd.xlane.f32.xlu0 %v1485
        %v1546 = vpop.xlane.xlu0 %1545
        %1547 = vadd.xlane.f32.xlu0 %v1488
        %v1548 = vpop.xlane.xlu0 %1547
        %1549 = vadd.xlane.f32.xlu0 %v1493
        %v1550 = vpop.xlane.xlu0 %1549
        %1551 = vadd.xlane.f32.xlu0 %v1496
        %v1552 = vpop.xlane.xlu0 %1551
        %1553 = vadd.xlane.f32.xlu0 %v1501
        %v1554 = vpop.xlane.xlu0 %1553
        %1555 = vadd.xlane.f32.xlu0 %v1504
        %v1556 = vpop.xlane.xlu0 %1555
        %1557 = vadd.xlane.f32.xlu0 %v1509
        %v1558 = vpop.xlane.xlu0 %1557
        %1559 = vadd.xlane.f32.xlu0 %v1512
        %v1560 = vpop.xlane.xlu0 %1559
        %1561 = vadd.xlane.f32.xlu0 %v1517
        %v1562 = vpop.xlane.xlu0 %1561
        %1563 = vadd.xlane.f32.xlu0 %v1520
        %v1564 = vpop.xlane.xlu0 %1563
        %1565 = vadd.xlane.f32.xlu0 %v1525
        %v1566 = vpop.xlane.xlu0 %1565
        %1567 = vadd.xlane.f32.xlu0 %v1528
        %v1568 = vpop.xlane.xlu0 %1567
        %1569 = vadd.xlane.f32.xlu0 %v1533
        %v1570 = vpop.xlane.xlu0 %1569
        %1571 = vadd.xlane.f32.xlu0 %v1536
        %v1572 = vpop.xlane.xlu0 %1571
        %v1573 = vmul.f32 %v1542, %v585
        %v1574 = vmul.f32 %v1544, %v585
        %v1575 = vmul.f32 %v1546, %v585
        %v1576 = vmul.f32 %v1548, %v585
        %v1577 = vmul.f32 %v1550, %v585
        %v1578 = vmul.f32 %v1552, %v585
        %v1579 = vmul.f32 %v1554, %v585
        %v1580 = vmul.f32 %v1556, %v585
        %v1581 = vmul.f32 %v1558, %v585
        %v1582 = vmul.f32 %v1560, %v585
        %v1583 = vmul.f32 %v1562, %v585
        %v1584 = vmul.f32 %v1564, %v585
        %v1585 = vmul.f32 %v1566, %v585
        %v1586 = vmul.f32 %v1568, %v585
        %v1587 = vmul.f32 %v1570, %v585
        %v1588 = vmul.f32 %v1572, %v585
        %v1589 = vsub.f32 %v1477, %v1573
        %v1590 = vsub.f32 %v1480, %v1574
        %v1591 = vsub.f32 %v1485, %v1575
        %v1592 = vsub.f32 %v1488, %v1576
        %v1593 = vsub.f32 %v1493, %v1577
        %v1594 = vsub.f32 %v1496, %v1578
        %v1595 = vsub.f32 %v1501, %v1579
        %v1596 = vsub.f32 %v1504, %v1580
        %v1597 = vsub.f32 %v1509, %v1581
        %v1598 = vsub.f32 %v1512, %v1582
        %v1599 = vsub.f32 %v1517, %v1583
        %v1600 = vsub.f32 %v1520, %v1584
        %v1601 = vsub.f32 %v1525, %v1585
        %v1602 = vsub.f32 %v1528, %v1586
        %v1603 = vsub.f32 %v1533, %v1587
        %v1604 = vsub.f32 %v1536, %v1588
        %v1605 = vmul.f32 %v1589, %v1589
        %v1606 = vmul.f32 %v1590, %v1590
        %v1607 = vmul.f32 %v1591, %v1591
        %v1608 = vmul.f32 %v1592, %v1592
        %v1609 = vmul.f32 %v1593, %v1593
        %v1610 = vmul.f32 %v1594, %v1594
        %v1611 = vmul.f32 %v1595, %v1595
        %v1612 = vmul.f32 %v1596, %v1596
        %v1613 = vmul.f32 %v1597, %v1597
        %v1614 = vmul.f32 %v1598, %v1598
        %v1615 = vmul.f32 %v1599, %v1599
        %v1616 = vmul.f32 %v1600, %v1600
        %v1617 = vmul.f32 %v1601, %v1601
        %v1618 = vmul.f32 %v1602, %v1602
        %v1619 = vmul.f32 %v1603, %v1603
        %v1620 = vmul.f32 %v1604, %v1604
        %1621 = vadd.xlane.f32.xlu0 %v1605
        %v1622 = vpop.xlane.xlu0 %1621
        %1623 = vadd.xlane.f32.xlu0 %v1606
        %v1624 = vpop.xlane.xlu0 %1623
        %1625 = vadd.xlane.f32.xlu0 %v1607
        %v1626 = vpop.xlane.xlu0 %1625
        %1627 = vadd.xlane.f32.xlu0 %v1608
        %v1628 = vpop.xlane.xlu0 %1627
        %1629 = vadd.xlane.f32.xlu0 %v1609
        %v1630 = vpop.xlane.xlu0 %1629
        %1631 = vadd.xlane.f32.xlu0 %v1610
        %v1632 = vpop.xlane.xlu0 %1631
        %1633 = vadd.xlane.f32.xlu0 %v1611
        %v1634 = vpop.xlane.xlu0 %1633
        %1635 = vadd.xlane.f32.xlu0 %v1612
        %v1636 = vpop.xlane.xlu0 %1635
        %1637 = vadd.xlane.f32.xlu0 %v1613
        %v1638 = vpop.xlane.xlu0 %1637
        %1639 = vadd.xlane.f32.xlu0 %v1614
        %v1640 = vpop.xlane.xlu0 %1639
        %1641 = vadd.xlane.f32.xlu0 %v1615
        %v1642 = vpop.xlane.xlu0 %1641
        %1643 = vadd.xlane.f32.xlu0 %v1616
        %v1644 = vpop.xlane.xlu0 %1643
        %1645 = vadd.xlane.f32.xlu0 %v1617
        %v1646 = vpop.xlane.xlu0 %1645
        %1647 = vadd.xlane.f32.xlu0 %v1618
        %v1648 = vpop.xlane.xlu0 %1647
        %1649 = vadd.xlane.f32.xlu0 %v1619
        %v1650 = vpop.xlane.xlu0 %1649
        %1651 = vadd.xlane.f32.xlu0 %v1620
        %v1652 = vpop.xlane.xlu0 %1651
        %v1653 = vmul.f32 %v1622, %v585
        %v1654 = vmul.f32 %v1624, %v585
        %v1655 = vmul.f32 %v1626, %v585
        %v1656 = vmul.f32 %v1628, %v585
        %v1657 = vmul.f32 %v1630, %v585
        %v1658 = vmul.f32 %v1632, %v585
        %v1659 = vmul.f32 %v1634, %v585
        %v1660 = vmul.f32 %v1636, %v585
        %v1661 = vmul.f32 %v1638, %v585
        %v1662 = vmul.f32 %v1640, %v585
        %v1663 = vmul.f32 %v1642, %v585
        %v1664 = vmul.f32 %v1644, %v585
        %v1665 = vmul.f32 %v1646, %v585
        %v1666 = vmul.f32 %v1648, %v585
        %v1667 = vmul.f32 %v1650, %v585
        %v1668 = vmul.f32 %v1652, %v585
        %v1669 = vadd.f32 %v1653, 1e-06
        %v1670 = vadd.f32 %v1654, 1e-06
        %v1671 = vadd.f32 %v1655, 1e-06
        %v1672 = vadd.f32 %v1656, 1e-06
        %v1673 = vadd.f32 %v1657, 1e-06
        %v1674 = vadd.f32 %v1658, 1e-06
        %v1675 = vadd.f32 %v1659, 1e-06
        %v1676 = vadd.f32 %v1660, 1e-06
        %v1677 = vadd.f32 %v1661, 1e-06
        %v1678 = vadd.f32 %v1662, 1e-06
        %v1679 = vadd.f32 %v1663, 1e-06
        %v1680 = vadd.f32 %v1664, 1e-06
        %v1681 = vadd.f32 %v1665, 1e-06
        %v1682 = vadd.f32 %v1666, 1e-06
        %v1683 = vadd.f32 %v1667, 1e-06
        %v1684 = vadd.f32 %v1668, 1e-06
        %v1685 = vrsqrt.pop %v1669
        %v1686 = vrsqrt.pop %v1670
        %v1687 = vrsqrt.pop %v1671
        %v1688 = vrsqrt.pop %v1672
        %v1689 = vrsqrt.pop %v1673
        %v1690 = vrsqrt.pop %v1674
        %v1691 = vrsqrt.pop %v1675
        %v1692 = vrsqrt.pop %v1676
        %v1693 = vrsqrt.pop %v1677
        %v1694 = vrsqrt.pop %v1678
        %v1695 = vrsqrt.pop %v1679
        %v1696 = vrsqrt.pop %v1680
        %v1697 = vrsqrt.pop %v1681
        %v1698 = vrsqrt.pop %v1682
        %v1699 = vrsqrt.pop %v1683
        %v1700 = vrsqrt.pop %v1684
        %v1701 = vmul.f32 %v1589, %v1685
        %v1702 = vmul.f32 %v1590, %v1686
        %v1703 = vmul.f32 %v1591, %v1687
        %v1704 = vmul.f32 %v1592, %v1688
        %v1705 = vmul.f32 %v1593, %v1689
        %v1706 = vmul.f32 %v1594, %v1690
        %v1707 = vmul.f32 %v1595, %v1691
        %v1708 = vmul.f32 %v1596, %v1692
        %v1709 = vmul.f32 %v1597, %v1693
        %v1710 = vmul.f32 %v1598, %v1694
        %v1711 = vmul.f32 %v1599, %v1695
        %v1712 = vmul.f32 %v1600, %v1696
        %v1713 = vmul.f32 %v1601, %v1697
        %v1714 = vmul.f32 %v1602, %v1698
        %v1715 = vmul.f32 %v1603, %v1699
        %v1716 = vmul.f32 %v1604, %v1700
        %v1718 = vlaneseq
        %v1719 = vshrl.u32 %v1718, 7
        %v1720 = vsub.s32 0, %v1719
        %v1721 = vrot.slane %v1539, %v1720
        %v1723 = vmul.f32 %v1701, %v1721
        %v1724 = vmul.f32 %v1702, %v1721
        %v1725 = vmul.f32 %v1703, %v1721
        %v1726 = vmul.f32 %v1704, %v1721
        %v1727 = vmul.f32 %v1705, %v1721
        %v1728 = vmul.f32 %v1706, %v1721
        %v1729 = vmul.f32 %v1707, %v1721
        %v1730 = vmul.f32 %v1708, %v1721
        %v1731 = vmul.f32 %v1709, %v1721
        %v1732 = vmul.f32 %v1710, %v1721
        %v1733 = vmul.f32 %v1711, %v1721
        %v1734 = vmul.f32 %v1712, %v1721
        %v1735 = vmul.f32 %v1713, %v1721
        %v1736 = vmul.f32 %v1714, %v1721
        %v1737 = vmul.f32 %v1715, %v1721
        %v1738 = vmul.f32 %v1716, %v1721
        %v1740 = vlaneseq
        %v1741 = vshrl.u32 %v1740, 7
        %v1742 = vsub.s32 0, %v1741
        %v1743 = vrot.slane %v1540, %v1742
        %v1745 = vadd.f32 %v1723, %v1743
        %v1746 = vadd.f32 %v1724, %v1743
        %v1747 = vadd.f32 %v1725, %v1743
        %v1748 = vadd.f32 %v1726, %v1743
        %v1749 = vadd.f32 %v1727, %v1743
        %v1750 = vadd.f32 %v1728, %v1743
        %v1751 = vadd.f32 %v1729, %v1743
        %v1752 = vadd.f32 %v1730, %v1743
        %v1753 = vadd.f32 %v1731, %v1743
        %v1754 = vadd.f32 %v1732, %v1743
        %v1755 = vadd.f32 %v1733, %v1743
        %v1756 = vadd.f32 %v1734, %v1743
        %v1757 = vadd.f32 %v1735, %v1743
        %v1758 = vadd.f32 %v1736, %v1743
        %v1759 = vadd.f32 %v1737, %v1743
        %v1760 = vadd.f32 %v1738, %v1743
        %v1761 = vpack.c.bf16 %v1746, %v1745
        %v1762 = vpack.c.bf16 %v1748, %v1747
        %v1763 = vpack.c.bf16 %v1750, %v1749
        %v1764 = vpack.c.bf16 %v1752, %v1751
        %v1765 = vpack.c.bf16 %v1754, %v1753
        %v1766 = vpack.c.bf16 %v1756, %v1755
        %v1767 = vpack.c.bf16 %v1758, %v1757
        %v1768 = vpack.c.bf16 %v1760, %v1759
        %v1769 = vld [vmem:[#allocation8] sm:$0xff]
        %v1770 = vld [vmem:[#allocation8 + $0x8] sm:$0xff]
        %v1771 = vld [vmem:[#allocation8 + $0x10] sm:$0xff]
        %v1772 = vld [vmem:[#allocation8 + $0x18] sm:$0xff]
        %v1773 = vld [vmem:[#allocation8 + $0x20] sm:$0xff]
        %v1774 = vld [vmem:[#allocation8 + $0x28] sm:$0xff]
        %v1775 = vld [vmem:[#allocation8 + $0x30] sm:$0xff]
        %v1776 = vld [vmem:[#allocation8 + $0x38] sm:$0xff]
        %v1777 = vld [vmem:[#allocation8 + $0x40] sm:$0xff]
        %v1778 = vld [vmem:[#allocation8 + $0x48] sm:$0xff]
        %v1779 = vld [vmem:[#allocation8 + $0x50] sm:$0xff]
        %v1780 = vld [vmem:[#allocation8 + $0x58] sm:$0xff]
        %v1781 = vld [vmem:[#allocation8 + $0x60] sm:$0xff]
        %v1782 = vld [vmem:[#allocation8 + $0x68] sm:$0xff]
        %v1783 = vld [vmem:[#allocation8 + $0x70] sm:$0xff]
        %v1784 = vld [vmem:[#allocation8 + $0x78] sm:$0xff]
        %v1785 = vld [vmem:[%s10] sm:$0x3]
        %v1787 = vlaneseq
        %v1788 = vshrl.u32 %v1787, 7
        %v1789 = vsub.s32 0, %v1788
        %v1790 = vrot.slane %v1785, %v1789
        %v1791 = vlaneseq
        %v1792 = vshrl.u32 %v1791, 7
        %v1793 = vsub.s32 1, %v1792
        %v1794 = vrot.slane %v1785, %v1793
        %v1813 = vunpack.c.l.b16 %v1769
        %v1814 = vunpack.c.h.b16 %v1769
        %v1815 = vunpack.c.l.b16 %v1770
        %v1816 = vunpack.c.h.b16 %v1770
        %v1817 = vunpack.c.l.b16 %v1771
        %v1818 = vunpack.c.h.b16 %v1771
        %v1819 = vunpack.c.l.b16 %v1772
        %v1820 = vunpack.c.h.b16 %v1772
        %v1821 = vunpack.c.l.b16 %v1773
        %v1822 = vunpack.c.h.b16 %v1773
        %v1823 = vunpack.c.l.b16 %v1774
        %v1824 = vunpack.c.h.b16 %v1774
        %v1825 = vunpack.c.l.b16 %v1775
        %v1826 = vunpack.c.h.b16 %v1775
        %v1827 = vunpack.c.l.b16 %v1776
        %v1828 = vunpack.c.h.b16 %v1776
        %v1829 = vunpack.c.l.b16 %v1777
        %v1830 = vunpack.c.h.b16 %v1777
        %v1831 = vunpack.c.l.b16 %v1778
        %v1832 = vunpack.c.h.b16 %v1778
        %v1833 = vunpack.c.l.b16 %v1779
        %v1834 = vunpack.c.h.b16 %v1779
        %v1835 = vunpack.c.l.b16 %v1780
        %v1836 = vunpack.c.h.b16 %v1780
        %v1837 = vunpack.c.l.b16 %v1781
        %v1838 = vunpack.c.h.b16 %v1781
        %v1839 = vunpack.c.l.b16 %v1782
        %v1840 = vunpack.c.h.b16 %v1782
        %v1841 = vunpack.c.l.b16 %v1783
        %v1842 = vunpack.c.h.b16 %v1783
        %v1843 = vunpack.c.l.b16 %v1784
        %v1844 = vunpack.c.h.b16 %v1784
        %v1845 = vpack.c.b16 %v1815, %v1813
        %v1846 = vpack.c.b16 %v1816, %v1814
        %v1847 = vpack.c.b16 %v1819, %v1817
        %v1848 = vpack.c.b16 %v1820, %v1818
        %v1849 = vpack.c.b16 %v1823, %v1821
        %v1850 = vpack.c.b16 %v1824, %v1822
        %v1851 = vpack.c.b16 %v1827, %v1825
        %v1852 = vpack.c.b16 %v1828, %v1826
        %v1853 = vpack.c.b16 %v1831, %v1829
        %v1854 = vpack.c.b16 %v1832, %v1830
        %v1855 = vpack.c.b16 %v1835, %v1833
        %v1856 = vpack.c.b16 %v1836, %v1834
        %v1857 = vpack.c.b16 %v1839, %v1837
        %v1858 = vpack.c.b16 %v1840, %v1838
        %v1859 = vpack.c.b16 %v1843, %v1841
        %v1860 = vpack.c.b16 %v1844, %v1842
        %1877 = vmatprep.subr.bf16.mxu0 %v1846
        %1878 = vmatpush1.bf16.msra.mxu0 %v1845
        %1879 = vmatprep.subr.bf16.mxu0 %v1848
        %1880 = vmatpush1.bf16.msra.mxu0 %v1847
        %1881 = vmatprep.subr.bf16.mxu0 %v1850
        %1882 = vmatpush1.bf16.msra.mxu0 %v1849
        %1883 = vmatprep.subr.bf16.mxu0 %v1852
        %1884 = vmatpush1.bf16.msra.mxu0 %v1851
        %1885 = vmatprep.subr.bf16.mxu0 %v1854
        %1886 = vmatpush1.bf16.msra.mxu0 %v1853
        %1887 = vmatprep.subr.bf16.mxu0 %v1856
        %1888 = vmatpush1.bf16.msra.mxu0 %v1855
        %1889 = vmatprep.subr.bf16.mxu0 %v1858
        %1890 = vmatpush1.bf16.msra.mxu0 %v1857
        %1891 = vmatprep.subr.bf16.mxu0 %v1860
        %1892 = vmatpush1.bf16.msra.mxu0 %v1859
        %1893 = vmatprep.subr.bf16.mxu0 0
        %1894 = vmatpush1.bf16.msra.mxu0 0
        %1895 = vmatprep.subr.bf16.mxu0 0
        %1896 = vmatpush1.bf16.msra.mxu0 0
        %1897 = vmatprep.subr.bf16.mxu0 0
        %1898 = vmatpush1.bf16.msra.mxu0 0
        %1899 = vmatprep.subr.bf16.mxu0 0
        %1900 = vmatpush1.bf16.msra.mxu0 0
        %1901 = vmatprep.subr.bf16.mxu0 0
        %1902 = vmatpush1.bf16.msra.mxu0 0
        %1903 = vmatprep.subr.bf16.mxu0 0
        %1904 = vmatpush1.bf16.msra.mxu0 0
        %1905 = vmatprep.subr.bf16.mxu0 0
        %1906 = vmatpush1.bf16.msra.mxu0 0
        %1907 = vmatprep.subr.bf16.mxu0 0
        %1908 = vmatpush1.bf16.msra.mxu0 0
        %1909 = vmatprep.mubr.bf16.mxu0 0
        %1910 = vmatmul.mubr.bf16.gmra.mrb[0].mxu0 %v1761
        %v1911 = vpop.f32.mrb[0].mxu0
        %v1912 = vadd.f32 %v1790, %v1911
        %v1913 = vpop.f32.mrb[0].mxu0
        %v1914 = vadd.f32 %v1794, %v1913
        %v1915 = vpop.f32.mrb[0].mxu0
        %v1916 = vadd.f32 %v1790, %v1915
        %v1917 = vpop.f32.mrb[0].mxu0
        %v1918 = vadd.f32 %v1794, %v1917
        %1919 = vmatprep.mubr.bf16.mxu0 0
        %1920 = vmatmul.mubr.bf16.gmra.mrb[0].mxu0 %v1762
        %v1921 = vpop.f32.mrb[0].mxu0
        %v1922 = vadd.f32 %v1790, %v1921
        %v1923 = vpop.f32.mrb[0].mxu0
        %v1924 = vadd.f32 %v1794, %v1923
        %v1925 = vpop.f32.mrb[0].mxu0
        %v1926 = vadd.f32 %v1790, %v1925
        %v1927 = vpop.f32.mrb[0].mxu0
        %v1928 = vadd.f32 %v1794, %v1927
        %1929 = vmatprep.mubr.bf16.mxu0 0
        %1930 = vmatmul.mubr.bf16.gmra.mrb[0].mxu0 %v1763
        %v1931 = vpop.f32.mrb[0].mxu0
        %v1932 = vadd.f32 %v1790, %v1931
        %v1933 = vpop.f32.mrb[0].mxu0
        %v1934 = vadd.f32 %v1794, %v1933
        %v1935 = vpop.f32.mrb[0].mxu0
        %v1936 = vadd.f32 %v1790, %v1935
        %v1937 = vpop.f32.mrb[0].mxu0
        %v1938 = vadd.f32 %v1794, %v1937
        %1939 = vmatprep.mubr.bf16.mxu0 0
        %1940 = vmatmul.mubr.bf16.gmra.mrb[0].mxu0 %v1764
        %v1941 = vpop.f32.mrb[0].mxu0
        %v1942 = vadd.f32 %v1790, %v1941
        %v1943 = vpop.f32.mrb[0].mxu0
        %v1944 = vadd.f32 %v1794, %v1943
        %v1945 = vpop.f32.mrb[0].mxu0
        %v1946 = vadd.f32 %v1790, %v1945
        %v1947 = vpop.f32.mrb[0].mxu0
        %v1948 = vadd.f32 %v1794, %v1947
        %1949 = vmatprep.mubr.bf16.mxu0 0
        %1950 = vmatmul.mubr.bf16.gmra.mrb[0].mxu0 %v1765
        %v1951 = vpop.f32.mrb[0].mxu0
        %v1952 = vadd.f32 %v1790, %v1951
        %v1953 = vpop.f32.mrb[0].mxu0
        %v1954 = vadd.f32 %v1794, %v1953
        %v1955 = vpop.f32.mrb[0].mxu0
        %v1956 = vadd.f32 %v1790, %v1955
        %v1957 = vpop.f32.mrb[0].mxu0
        %v1958 = vadd.f32 %v1794, %v1957
        %1959 = vmatprep.mubr.bf16.mxu0 0
        %1960 = vmatmul.mubr.bf16.gmra.mrb[0].mxu0 %v1766
        %v1961 = vpop.f32.mrb[0].mxu0
        %v1962 = vadd.f32 %v1790, %v1961
        %v1963 = vpop.f32.mrb[0].mxu0
        %v1964 = vadd.f32 %v1794, %v1963
        %v1965 = vpop.f32.mrb[0].mxu0
        %v1966 = vadd.f32 %v1790, %v1965
        %v1967 = vpop.f32.mrb[0].mxu0
        %v1968 = vadd.f32 %v1794, %v1967
        %1969 = vmatprep.mubr.bf16.mxu0 0
        %1970 = vmatmul.mubr.bf16.gmra.mrb[0].mxu0 %v1767
        %v1971 = vpop.f32.mrb[0].mxu0
        %v1972 = vadd.f32 %v1790, %v1971
        %v1973 = vpop.f32.mrb[0].mxu0
        %v1974 = vadd.f32 %v1794, %v1973
        %v1975 = vpop.f32.mrb[0].mxu0
        %v1976 = vadd.f32 %v1790, %v1975
        %v1977 = vpop.f32.mrb[0].mxu0
        %v1978 = vadd.f32 %v1794, %v1977
        %1979 = vmatprep.mubr.bf16.mxu0 0
        %1980 = vmatmul.mubr.bf16.gmra.mrb[0].mxu0 %v1768
        %v1981 = vpop.f32.mrb[0].mxu0
        %v1982 = vadd.f32 %v1790, %v1981
        %v1983 = vpop.f32.mrb[0].mxu0
        %v1984 = vadd.f32 %v1794, %v1983
        %v1985 = vpop.f32.mrb[0].mxu0
        %v1986 = vadd.f32 %v1790, %v1985
        %v1987 = vpop.f32.mrb[0].mxu0
        %v1988 = vadd.f32 %v1794, %v1987
        %1989 = vdwg.mxu0
        %v1990 = vmul.f32 %v1912, 0.5
        %v1991 = vmul.f32 %v1914, 0.5
        %v1992 = vmul.f32 %v1916, 0.5
        %v1993 = vmul.f32 %v1918, 0.5
        %v1994 = vmul.f32 %v1922, 0.5
        %v1995 = vmul.f32 %v1924, 0.5
        %v1996 = vmul.f32 %v1926, 0.5
        %v1997 = vmul.f32 %v1928, 0.5
        %v1998 = vmul.f32 %v1932, 0.5
        %v1999 = vmul.f32 %v1934, 0.5
        %v2000 = vmul.f32 %v1936, 0.5
        %v2001 = vmul.f32 %v1938, 0.5
        %v2002 = vmul.f32 %v1942, 0.5
        %v2003 = vmul.f32 %v1944, 0.5
        %v2004 = vmul.f32 %v1946, 0.5
        %v2005 = vmul.f32 %v1948, 0.5
        %v2006 = vmul.f32 %v1952, 0.5
        %v2007 = vmul.f32 %v1954, 0.5
        %v2008 = vmul.f32 %v1956, 0.5
        %v2009 = vmul.f32 %v1958, 0.5
        %v2010 = vmul.f32 %v1962, 0.5
        %v2011 = vmul.f32 %v1964, 0.5
        %v2012 = vmul.f32 %v1966, 0.5
        %v2013 = vmul.f32 %v1968, 0.5
        %v2014 = vmul.f32 %v1972, 0.5
        %v2015 = vmul.f32 %v1974, 0.5
        %v2016 = vmul.f32 %v1976, 0.5
        %v2017 = vmul.f32 %v1978, 0.5
        %v2018 = vmul.f32 %v1982, 0.5
        %v2019 = vmul.f32 %v1984, 0.5
        %v2020 = vmul.f32 %v1986, 0.5
        %v2021 = vmul.f32 %v1988, 0.5
        %v2022 = vmul.f32 %v1912, 0.044715
        %v2023 = vmul.f32 %v1914, 0.044715
        %v2024 = vmul.f32 %v1916, 0.044715
        %v2025 = vmul.f32 %v1918, 0.044715
        %v2026 = vmul.f32 %v1922, 0.044715
        %v2027 = vmul.f32 %v1924, 0.044715
        %v2028 = vmul.f32 %v1926, 0.044715
        %v2029 = vmul.f32 %v1928, 0.044715
        %v2030 = vmul.f32 %v1932, 0.044715
        %v2031 = vmul.f32 %v1934, 0.044715
        %v2032 = vmul.f32 %v1936, 0.044715
        %v2033 = vmul.f32 %v1938, 0.044715
        %v2034 = vmul.f32 %v1942, 0.044715
        %v2035 = vmul.f32 %v1944, 0.044715
        %v2036 = vmul.f32 %v1946, 0.044715
        %v2037 = vmul.f32 %v1948, 0.044715
        %v2038 = vmul.f32 %v1952, 0.044715
        %v2039 = vmul.f32 %v1954, 0.044715
        %v2040 = vmul.f32 %v1956, 0.044715
        %v2041 = vmul.f32 %v1958, 0.044715
        %v2042 = vmul.f32 %v1962, 0.044715
        %v2043 = vmul.f32 %v1964, 0.044715
        %v2044 = vmul.f32 %v1966, 0.044715
        %v2045 = vmul.f32 %v1968, 0.044715
        %v2046 = vmul.f32 %v1972, 0.044715
        %v2047 = vmul.f32 %v1974, 0.044715
        %v2048 = vmul.f32 %v1976, 0.044715
        %v2049 = vmul.f32 %v1978, 0.044715
        %v2050 = vmul.f32 %v1982, 0.044715
        %v2051 = vmul.f32 %v1984, 0.044715
        %v2052 = vmul.f32 %v1986, 0.044715
        %v2053 = vmul.f32 %v1988, 0.044715
        %v2054 = vmul.f32 %v2022, %v1912
        %v2055 = vmul.f32 %v2023, %v1914
        %v2056 = vmul.f32 %v2024, %v1916
        %v2057 = vmul.f32 %v2025, %v1918
        %v2058 = vmul.f32 %v2026, %v1922
        %v2059 = vmul.f32 %v2027, %v1924
        %v2060 = vmul.f32 %v2028, %v1926
        %v2061 = vmul.f32 %v2029, %v1928
        %v2062 = vmul.f32 %v2030, %v1932
        %v2063 = vmul.f32 %v2031, %v1934
        %v2064 = vmul.f32 %v2032, %v1936
        %v2065 = vmul.f32 %v2033, %v1938
        %v2066 = vmul.f32 %v2034, %v1942
        %v2067 = vmul.f32 %v2035, %v1944
        %v2068 = vmul.f32 %v2036, %v1946
        %v2069 = vmul.f32 %v2037, %v1948
        %v2070 = vmul.f32 %v2038, %v1952
        %v2071 = vmul.f32 %v2039, %v1954
        %v2072 = vmul.f32 %v2040, %v1956
        %v2073 = vmul.f32 %v2041, %v1958
        %v2074 = vmul.f32 %v2042, %v1962
        %v2075 = vmul.f32 %v2043, %v1964
        %v2076 = vmul.f32 %v2044, %v1966
        %v2077 = vmul.f32 %v2045, %v1968
        %v2078 = vmul.f32 %v2046, %v1972
        %v2079 = vmul.f32 %v2047, %v1974
        %v2080 = vmul.f32 %v2048, %v1976
        %v2081 = vmul.f32 %v2049, %v1978
        %v2082 = vmul.f32 %v2050, %v1982
        %v2083 = vmul.f32 %v2051, %v1984
        %v2084 = vmul.f32 %v2052, %v1986
        %v2085 = vmul.f32 %v2053, %v1988
        %v2086 = vmul.f32 %v2054, %v1912
        %v2087 = vmul.f32 %v2055, %v1914
        %v2088 = vmul.f32 %v2056, %v1916
        %v2089 = vmul.f32 %v2057, %v1918
        %v2090 = vmul.f32 %v2058, %v1922
        %v2091 = vmul.f32 %v2059, %v1924
        %v2092 = vmul.f32 %v2060, %v1926
        %v2093 = vmul.f32 %v2061, %v1928
        %v2094 = vmul.f32 %v2062, %v1932
        %v2095 = vmul.f32 %v2063, %v1934
        %v2096 = vmul.f32 %v2064, %v1936
        %v2097 = vmul.f32 %v2065, %v1938
        %v2098 = vmul.f32 %v2066, %v1942
        %v2099 = vmul.f32 %v2067, %v1944
        %v2100 = vmul.f32 %v2068, %v1946
        %v2101 = vmul.f32 %v2069, %v1948
        %v2102 = vmul.f32 %v2070, %v1952
        %v2103 = vmul.f32 %v2071, %v1954
        %v2104 = vmul.f32 %v2072, %v1956
        %v2105 = vmul.f32 %v2073, %v1958
        %v2106 = vmul.f32 %v2074, %v1962
        %v2107 = vmul.f32 %v2075, %v1964
        %v2108 = vmul.f32 %v2076, %v1966
        %v2109 = vmul.f32 %v2077, %v1968
        %v2110 = vmul.f32 %v2078, %v1972
        %v2111 = vmul.f32 %v2079, %v1974
        %v2112 = vmul.f32 %v2080, %v1976
        %v2113 = vmul.f32 %v2081, %v1978
        %v2114 = vmul.f32 %v2082, %v1982
        %v2115 = vmul.f32 %v2083, %v1984
        %v2116 = vmul.f32 %v2084, %v1986
        %v2117 = vmul.f32 %v2085, %v1988
        %v2118 = vadd.f32 %v1912, %v2086
        %v2119 = vadd.f32 %v1914, %v2087
        %v2120 = vadd.f32 %v1916, %v2088
        %v2121 = vadd.f32 %v1918, %v2089
        %v2122 = vadd.f32 %v1922, %v2090
        %v2123 = vadd.f32 %v1924, %v2091
        %v2124 = vadd.f32 %v1926, %v2092
        %v2125 = vadd.f32 %v1928, %v2093
        %v2126 = vadd.f32 %v1932, %v2094
        %v2127 = vadd.f32 %v1934, %v2095
        %v2128 = vadd.f32 %v1936, %v2096
        %v2129 = vadd.f32 %v1938, %v2097
        %v2130 = vadd.f32 %v1942, %v2098
        %v2131 = vadd.f32 %v1944, %v2099
        %v2132 = vadd.f32 %v1946, %v2100
        %v2133 = vadd.f32 %v1948, %v2101
        %v2134 = vadd.f32 %v1952, %v2102
        %v2135 = vadd.f32 %v1954, %v2103
        %v2136 = vadd.f32 %v1956, %v2104
        %v2137 = vadd.f32 %v1958, %v2105
        %v2138 = vadd.f32 %v1962, %v2106
        %v2139 = vadd.f32 %v1964, %v2107
        %v2140 = vadd.f32 %v1966, %v2108
        %v2141 = vadd.f32 %v1968, %v2109
        %v2142 = vadd.f32 %v1972, %v2110
        %v2143 = vadd.f32 %v1974, %v2111
        %v2144 = vadd.f32 %v1976, %v2112
        %v2145 = vadd.f32 %v1978, %v2113
        %v2146 = vadd.f32 %v1982, %v2114
        %v2147 = vadd.f32 %v1984, %v2115
        %v2148 = vadd.f32 %v1986, %v2116
        %v2149 = vadd.f32 %v1988, %v2117
        %v2150 = vmul.f32 %v2118, 0.7978846
        %v2151 = vmul.f32 %v2119, 0.7978846
        %v2152 = vmul.f32 %v2120, 0.7978846
        %v2153 = vmul.f32 %v2121, 0.7978846
        %v2154 = vmul.f32 %v2122, 0.7978846
        %v2155 = vmul.f32 %v2123, 0.7978846
        %v2156 = vmul.f32 %v2124, 0.7978846
        %v2157 = vmul.f32 %v2125, 0.7978846
        %v2158 = vmul.f32 %v2126, 0.7978846
        %v2159 = vmul.f32 %v2127, 0.7978846
        %v2160 = vmul.f32 %v2128, 0.7978846
        %v2161 = vmul.f32 %v2129, 0.7978846
        %v2162 = vmul.f32 %v2130, 0.7978846
        %v2163 = vmul.f32 %v2131, 0.7978846
        %v2164 = vmul.f32 %v2132, 0.7978846
        %v2165 = vmul.f32 %v2133, 0.7978846
        %v2166 = vmul.f32 %v2134, 0.7978846
        %v2167 = vmul.f32 %v2135, 0.7978846
        %v2168 = vmul.f32 %v2136, 0.7978846
        %v2169 = vmul.f32 %v2137, 0.7978846
        %v2170 = vmul.f32 %v2138, 0.7978846
        %v2171 = vmul.f32 %v2139, 0.7978846
        %v2172 = vmul.f32 %v2140, 0.7978846
        %v2173 = vmul.f32 %v2141, 0.7978846
        %v2174 = vmul.f32 %v2142, 0.7978846
        %v2175 = vmul.f32 %v2143, 0.7978846
        %v2176 = vmul.f32 %v2144, 0.7978846
        %v2177 = vmul.f32 %v2145, 0.7978846
        %v2178 = vmul.f32 %v2146, 0.7978846
        %v2179 = vmul.f32 %v2147, 0.7978846
        %v2180 = vmul.f32 %v2148, 0.7978846
        %v2181 = vmul.f32 %v2149, 0.7978846
        %v2182 = vtanh.pop %v2150
        %v2183 = vtanh.pop %v2151
        %v2184 = vtanh.pop %v2152
        %v2185 = vtanh.pop %v2153
        %v2186 = vtanh.pop %v2154
        %v2187 = vtanh.pop %v2155
        %v2188 = vtanh.pop %v2156
        %v2189 = vtanh.pop %v2157
        %v2190 = vtanh.pop %v2158
        %v2191 = vtanh.pop %v2159
        %v2192 = vtanh.pop %v2160
        %v2193 = vtanh.pop %v2161
        %v2194 = vtanh.pop %v2162
        %v2195 = vtanh.pop %v2163
        %v2196 = vtanh.pop %v2164
        %v2197 = vtanh.pop %v2165
        %v2198 = vtanh.pop %v2166
        %v2199 = vtanh.pop %v2167
        %v2200 = vtanh.pop %v2168
        %v2201 = vtanh.pop %v2169
        %v2202 = vtanh.pop %v2170
        %v2203 = vtanh.pop %v2171
        %v2204 = vtanh.pop %v2172
        %v2205 = vtanh.pop %v2173
        %v2206 = vtanh.pop %v2174
        %v2207 = vtanh.pop %v2175
        %v2208 = vtanh.pop %v2176
        %v2209 = vtanh.pop %v2177
        %v2210 = vtanh.pop %v2178
        %v2211 = vtanh.pop %v2179
        %v2212 = vtanh.pop %v2180
        %v2213 = vtanh.pop %v2181
        %v2214 = vadd.f32 %v2182, 1.0
        %v2215 = vadd.f32 %v2183, 1.0
        %v2216 = vadd.f32 %v2184, 1.0
        %v2217 = vadd.f32 %v2185, 1.0
        %v2218 = vadd.f32 %v2186, 1.0
        %v2219 = vadd.f32 %v2187, 1.0
        %v2220 = vadd.f32 %v2188, 1.0
        %v2221 = vadd.f32 %v2189, 1.0
        %v2222 = vadd.f32 %v2190, 1.0
        %v2223 = vadd.f32 %v2191, 1.0
        %v2224 = vadd.f32 %v2192, 1.0
        %v2225 = vadd.f32 %v2193, 1.0
        %v2226 = vadd.f32 %v2194, 1.0
        %v2227 = vadd.f32 %v2195, 1.0
        %v2228 = vadd.f32 %v2196, 1.0
        %v2229 = vadd.f32 %v2197, 1.0
        %v2230 = vadd.f32 %v2198, 1.0
        %v2231 = vadd.f32 %v2199, 1.0
        %v2232 = vadd.f32 %v2200, 1.0
        %v2233 = vadd.f32 %v2201, 1.0
        %v2234 = vadd.f32 %v2202, 1.0
        %v2235 = vadd.f32 %v2203, 1.0
        %v2236 = vadd.f32 %v2204, 1.0
        %v2237 = vadd.f32 %v2205, 1.0
        %v2238 = vadd.f32 %v2206, 1.0
        %v2239 = vadd.f32 %v2207, 1.0
        %v2240 = vadd.f32 %v2208, 1.0
        %v2241 = vadd.f32 %v2209, 1.0
        %v2242 = vadd.f32 %v2210, 1.0
        %v2243 = vadd.f32 %v2211, 1.0
        %v2244 = vadd.f32 %v2212, 1.0
        %v2245 = vadd.f32 %v2213, 1.0
        %v2246 = vmul.f32 %v1990, %v2214
        %v2247 = vmul.f32 %v1991, %v2215
        %v2248 = vmul.f32 %v1992, %v2216
        %v2249 = vmul.f32 %v1993, %v2217
        %v2250 = vmul.f32 %v1994, %v2218
        %v2251 = vmul.f32 %v1995, %v2219
        %v2252 = vmul.f32 %v1996, %v2220
        %v2253 = vmul.f32 %v1997, %v2221
        %v2254 = vmul.f32 %v1998, %v2222
        %v2255 = vmul.f32 %v1999, %v2223
        %v2256 = vmul.f32 %v2000, %v2224
        %v2257 = vmul.f32 %v2001, %v2225
        %v2258 = vmul.f32 %v2002, %v2226
        %v2259 = vmul.f32 %v2003, %v2227
        %v2260 = vmul.f32 %v2004, %v2228
        %v2261 = vmul.f32 %v2005, %v2229
        %v2262 = vmul.f32 %v2006, %v2230
        %v2263 = vmul.f32 %v2007, %v2231
        %v2264 = vmul.f32 %v2008, %v2232
        %v2265 = vmul.f32 %v2009, %v2233
        %v2266 = vmul.f32 %v2010, %v2234
        %v2267 = vmul.f32 %v2011, %v2235
        %v2268 = vmul.f32 %v2012, %v2236
        %v2269 = vmul.f32 %v2013, %v2237
        %v2270 = vmul.f32 %v2014, %v2238
        %v2271 = vmul.f32 %v2015, %v2239
        %v2272 = vmul.f32 %v2016, %v2240
        %v2273 = vmul.f32 %v2017, %v2241
        %v2274 = vmul.f32 %v2018, %v2242
        %v2275 = vmul.f32 %v2019, %v2243
        %v2276 = vmul.f32 %v2020, %v2244
        %v2277 = vmul.f32 %v2021, %v2245
        %v2278 = vpack.c.bf16 %v2248, %v2246
        %v2279 = vpack.c.bf16 %v2249, %v2247
        %v2280 = vpack.c.bf16 %v2252, %v2250
        %v2281 = vpack.c.bf16 %v2253, %v2251
        %v2282 = vpack.c.bf16 %v2256, %v2254
        %v2283 = vpack.c.bf16 %v2257, %v2255
        %v2284 = vpack.c.bf16 %v2260, %v2258
        %v2285 = vpack.c.bf16 %v2261, %v2259
        %v2286 = vpack.c.bf16 %v2264, %v2262
        %v2287 = vpack.c.bf16 %v2265, %v2263
        %v2288 = vpack.c.bf16 %v2268, %v2266
        %v2289 = vpack.c.bf16 %v2269, %v2267
        %v2290 = vpack.c.bf16 %v2272, %v2270
        %v2291 = vpack.c.bf16 %v2273, %v2271
        %v2292 = vpack.c.bf16 %v2276, %v2274
        %v2293 = vpack.c.bf16 %v2277, %v2275
        %v2294 = vld [vmem:[#allocation10] sm:$0xf]
        %v2295 = vld [vmem:[#allocation10 + $0x4] sm:$0xf]
        %v2296 = vld [vmem:[#allocation10 + $0x8] sm:$0xf]
        %v2297 = vld [vmem:[#allocation10 + $0xc] sm:$0xf]
        %v2298 = vld [vmem:[#allocation10 + $0x10] sm:$0xf]
        %v2299 = vld [vmem:[#allocation10 + $0x14] sm:$0xf]
        %v2300 = vld [vmem:[#allocation10 + $0x18] sm:$0xf]
        %v2301 = vld [vmem:[#allocation10 + $0x1c] sm:$0xf]
        %v2302 = vld [vmem:[#allocation10 + $0x20] sm:$0xf]
        %v2303 = vld [vmem:[#allocation10 + $0x24] sm:$0xf]
        %v2304 = vld [vmem:[#allocation10 + $0x28] sm:$0xf]
        %v2305 = vld [vmem:[#allocation10 + $0x2c] sm:$0xf]
        %v2306 = vld [vmem:[#allocation10 + $0x30] sm:$0xf]
        %v2307 = vld [vmem:[#allocation10 + $0x34] sm:$0xf]
        %v2308 = vld [vmem:[#allocation10 + $0x38] sm:$0xf]
        %v2309 = vld [vmem:[#allocation10 + $0x3c] sm:$0xf]
        %v2310 = vld [vmem:[#allocation10 + $0x40] sm:$0xf]
        %v2311 = vld [vmem:[#allocation10 + $0x44] sm:$0xf]
        %v2312 = vld [vmem:[#allocation10 + $0x48] sm:$0xf]
        %v2313 = vld [vmem:[#allocation10 + $0x4c] sm:$0xf]
        %v2314 = vld [vmem:[#allocation10 + $0x50] sm:$0xf]
        %v2315 = vld [vmem:[#allocation10 + $0x54] sm:$0xf]
        %v2316 = vld [vmem:[#allocation10 + $0x58] sm:$0xf]
        %v2317 = vld [vmem:[#allocation10 + $0x5c] sm:$0xf]
        %v2318 = vld [vmem:[#allocation10 + $0x60] sm:$0xf]
        %v2319 = vld [vmem:[#allocation10 + $0x64] sm:$0xf]
        %v2320 = vld [vmem:[#allocation10 + $0x68] sm:$0xf]
        %v2321 = vld [vmem:[#allocation10 + $0x6c] sm:$0xf]
        %v2322 = vld [vmem:[#allocation10 + $0x70] sm:$0xf]
        %v2323 = vld [vmem:[#allocation10 + $0x74] sm:$0xf]
        %v2324 = vld [vmem:[#allocation10 + $0x78] sm:$0xf]
        %v2325 = vld [vmem:[#allocation10 + $0x7c] sm:$0xf]
        %v2326 = vld [vmem:[%s12] sm:$0x1]
        %v2328 = vlaneseq
        %v2329 = vshrl.u32 %v2328, 7
        %v2330 = vsub.s32 0, %v2329
        %v2331 = vrot.slane %v2326, %v2330
        %v2365 = vunpack.c.l.b16 %v2294
        %v2366 = vunpack.c.l.b16 %v2295
        %v2367 = vunpack.c.l.b16 %v2296
        %v2368 = vunpack.c.l.b16 %v2297
        %v2369 = vunpack.c.l.b16 %v2298
        %v2370 = vunpack.c.l.b16 %v2299
        %v2371 = vunpack.c.l.b16 %v2300
        %v2372 = vunpack.c.l.b16 %v2301
        %v2373 = vunpack.c.l.b16 %v2302
        %v2374 = vunpack.c.l.b16 %v2303
        %v2375 = vunpack.c.l.b16 %v2304
        %v2376 = vunpack.c.l.b16 %v2305
        %v2377 = vunpack.c.l.b16 %v2306
        %v2378 = vunpack.c.l.b16 %v2307
        %v2379 = vunpack.c.l.b16 %v2308
        %v2380 = vunpack.c.l.b16 %v2309
        %v2381 = vunpack.c.l.b16 %v2310
        %v2382 = vunpack.c.l.b16 %v2311
        %v2383 = vunpack.c.l.b16 %v2312
        %v2384 = vunpack.c.l.b16 %v2313
        %v2385 = vunpack.c.l.b16 %v2314
        %v2386 = vunpack.c.l.b16 %v2315
        %v2387 = vunpack.c.l.b16 %v2316
        %v2388 = vunpack.c.l.b16 %v2317
        %v2389 = vunpack.c.l.b16 %v2318
        %v2390 = vunpack.c.l.b16 %v2319
        %v2391 = vunpack.c.l.b16 %v2320
        %v2392 = vunpack.c.l.b16 %v2321
        %v2393 = vunpack.c.l.b16 %v2322
        %v2394 = vunpack.c.l.b16 %v2323
        %v2395 = vunpack.c.l.b16 %v2324
        %v2396 = vunpack.c.l.b16 %v2325
        %v2397 = vpack.c.b16 %v2366, %v2365
        %v2398 = vpack.c.b16 %v2368, %v2367
        %v2399 = vpack.c.b16 %v2370, %v2369
        %v2400 = vpack.c.b16 %v2372, %v2371
        %v2401 = vpack.c.b16 %v2374, %v2373
        %v2402 = vpack.c.b16 %v2376, %v2375
        %v2403 = vpack.c.b16 %v2378, %v2377
        %v2404 = vpack.c.b16 %v2380, %v2379
        %v2405 = vpack.c.b16 %v2382, %v2381
        %v2406 = vpack.c.b16 %v2384, %v2383
        %v2407 = vpack.c.b16 %v2386, %v2385
        %v2408 = vpack.c.b16 %v2388, %v2387
        %v2409 = vpack.c.b16 %v2390, %v2389
        %v2410 = vpack.c.b16 %v2392, %v2391
        %v2411 = vpack.c.b16 %v2394, %v2393
        %v2412 = vpack.c.b16 %v2396, %v2395
        %2429 = vmatprep.subr.bf16.mxu0 0
        %2430 = vmatpush1.bf16.msra.mxu0 %v2397
        %2431 = vmatprep.subr.bf16.mxu0 0
        %2432 = vmatpush1.bf16.msra.mxu0 %v2398
        %2433 = vmatprep.subr.bf16.mxu0 0
        %2434 = vmatpush1.bf16.msra.mxu0 %v2399
        %2435 = vmatprep.subr.bf16.mxu0 0
        %2436 = vmatpush1.bf16.msra.mxu0 %v2400
        %2437 = vmatprep.subr.bf16.mxu0 0
        %2438 = vmatpush1.bf16.msra.mxu0 %v2401
        %2439 = vmatprep.subr.bf16.mxu0 0
        %2440 = vmatpush1.bf16.msra.mxu0 %v2402
        %2441 = vmatprep.subr.bf16.mxu0 0
        %2442 = vmatpush1.bf16.msra.mxu0 %v2403
        %2443 = vmatprep.subr.bf16.mxu0 0
        %2444 = vmatpush1.bf16.msra.mxu0 %v2404
        %2445 = vmatprep.subr.bf16.mxu0 0
        %2446 = vmatpush1.bf16.msra.mxu0 %v2405
        %2447 = vmatprep.subr.bf16.mxu0 0
        %2448 = vmatpush1.bf16.msra.mxu0 %v2406
        %2449 = vmatprep.subr.bf16.mxu0 0
        %2450 = vmatpush1.bf16.msra.mxu0 %v2407
        %2451 = vmatprep.subr.bf16.mxu0 0
        %2452 = vmatpush1.bf16.msra.mxu0 %v2408
        %2453 = vmatprep.subr.bf16.mxu0 0
        %2454 = vmatpush1.bf16.msra.mxu0 %v2409
        %2455 = vmatprep.subr.bf16.mxu0 0
        %2456 = vmatpush1.bf16.msra.mxu0 %v2410
        %2457 = vmatprep.subr.bf16.mxu0 0
        %2458 = vmatpush1.bf16.msra.mxu0 %v2411
        %2459 = vmatprep.subr.bf16.mxu0 0
        %2460 = vmatpush1.bf16.msra.mxu0 %v2412
        %2461 = vmatprep.mubr.bf16.mxu0 %v2279
        %2462 = vmatmul.mubr.bf16.gmra.mrb[0].mxu0 %v2278
        %v2463 = vpop.f32.mrb[0].mxu0
        %v2464 = vadd.f32 %v2331, %v2463
        %v2465 = vpop.f32.mrb[0].mxu0
        %v2466 = vpop.f32.mrb[0].mxu0
        %v2467 = vadd.f32 %v2331, %v2466
        %v2468 = vpop.f32.mrb[0].mxu0
        %2469 = vmatprep.mubr.bf16.mxu0 %v2281
        %2470 = vmatmul.mubr.bf16.gmra.mrb[0].mxu0 %v2280
        %v2471 = vpop.f32.mrb[0].mxu0
        %v2472 = vadd.f32 %v2331, %v2471
        %v2473 = vpop.f32.mrb[0].mxu0
        %v2474 = vpop.f32.mrb[0].mxu0
        %v2475 = vadd.f32 %v2331, %v2474
        %v2476 = vpop.f32.mrb[0].mxu0
        %2477 = vmatprep.mubr.bf16.mxu0 %v2283
        %2478 = vmatmul.mubr.bf16.gmra.mrb[0].mxu0 %v2282
        %v2479 = vpop.f32.mrb[0].mxu0
        %v2480 = vadd.f32 %v2331, %v2479
        %v2481 = vpop.f32.mrb[0].mxu0
        %v2482 = vpop.f32.mrb[0].mxu0
        %v2483 = vadd.f32 %v2331, %v2482
        %v2484 = vpop.f32.mrb[0].mxu0
        %2485 = vmatprep.mubr.bf16.mxu0 %v2285
        %2486 = vmatmul.mubr.bf16.gmra.mrb[0].mxu0 %v2284
        %v2487 = vpop.f32.mrb[0].mxu0
        %v2488 = vadd.f32 %v2331, %v2487
        %v2489 = vpop.f32.mrb[0].mxu0
        %v2490 = vpop.f32.mrb[0].mxu0
        %v2491 = vadd.f32 %v2331, %v2490
        %v2492 = vpop.f32.mrb[0].mxu0
        %2493 = vmatprep.mubr.bf16.mxu0 %v2287
        %2494 = vmatmul.mubr.bf16.gmra.mrb[0].mxu0 %v2286
        %v2495 = vpop.f32.mrb[0].mxu0
        %v2496 = vadd.f32 %v2331, %v2495
        %v2497 = vpop.f32.mrb[0].mxu0
        %v2498 = vpop.f32.mrb[0].mxu0
        %v2499 = vadd.f32 %v2331, %v2498
        %v2500 = vpop.f32.mrb[0].mxu0
        %2501 = vmatprep.mubr.bf16.mxu0 %v2289
        %2502 = vmatmul.mubr.bf16.gmra.mrb[0].mxu0 %v2288
        %v2503 = vpop.f32.mrb[0].mxu0
        %v2504 = vadd.f32 %v2331, %v2503
        %v2505 = vpop.f32.mrb[0].mxu0
        %v2506 = vpop.f32.mrb[0].mxu0
        %v2507 = vadd.f32 %v2331, %v2506
        %v2508 = vpop.f32.mrb[0].mxu0
        %2509 = vmatprep.mubr.bf16.mxu0 %v2291
        %2510 = vmatmul.mubr.bf16.gmra.mrb[0].mxu0 %v2290
        %v2511 = vpop.f32.mrb[0].mxu0
        %v2512 = vadd.f32 %v2331, %v2511
        %v2513 = vpop.f32.mrb[0].mxu0
        %v2514 = vpop.f32.mrb[0].mxu0
        %v2515 = vadd.f32 %v2331, %v2514
        %v2516 = vpop.f32.mrb[0].mxu0
        %2517 = vmatprep.mubr.bf16.mxu0 %v2293
        %2518 = vmatmul.mubr.bf16.gmra.mrb[0].mxu0 %v2292
        %v2519 = vpop.f32.mrb[0].mxu0
        %v2520 = vadd.f32 %v2331, %v2519
        %v2521 = vpop.f32.mrb[0].mxu0
        %v2522 = vpop.f32.mrb[0].mxu0
        %v2523 = vadd.f32 %v2331, %v2522
        %v2524 = vpop.f32.mrb[0].mxu0
        %2525 = vdwg.mxu0
        %2526 = vxpose.xlu0.b32.start [1/16] %v2464, 128
        %2527 = vxpose.xlu0.b32.cont [2/16] %v2467, 128
        %2528 = vxpose.xlu0.b32.cont [3/16] %v2472, 128
        %2529 = vxpose.xlu0.b32.cont [4/16] %v2475, 128
        %2530 = vxpose.xlu0.b32.cont [5/16] %v2480, 128
        %2531 = vxpose.xlu0.b32.cont [6/16] %v2483, 128
        %2532 = vxpose.xlu0.b32.cont [7/16] %v2488, 128
        %2533 = vxpose.xlu0.b32.cont [8/16] %v2491, 128
        %2534 = vxpose.xlu0.b32.cont [9/16] %v2496, 128
        %2535 = vxpose.xlu0.b32.cont [10/16] %v2499, 128
        %2536 = vxpose.xlu0.b32.cont [11/16] %v2504, 128
        %2537 = vxpose.xlu0.b32.cont [12/16] %v2507, 128
        %2538 = vxpose.xlu0.b32.cont [13/16] %v2512, 128
        %2539 = vxpose.xlu0.b32.cont [14/16] %v2515, 128
        %2540 = vxpose.xlu0.b32.cont [15/16] %v2520, 128
        %2541 = vxpose.xlu0.b32.end [16/16] %v2523, 128
        %v2542 = vpop.trf.xlu0
        %v2543 = vpop.trf.xlu0
        %v2544 = vpop.trf.xlu0
        %v2545 = vpop.trf.xlu0
        %v2546 = vpop.trf.xlu0
        %v2547 = vpop.trf.xlu0
        %v2548 = vpop.trf.xlu0
        %v2549 = vpop.trf.xlu0
        %v2550 = vpop.trf.xlu0
        %v2551 = vpop.trf.xlu0
        %v2552 = vpop.trf.xlu0
        %v2553 = vpop.trf.xlu0
        %v2554 = vpop.trf.xlu0
        %v2555 = vpop.trf.xlu0
        %v2556 = vpop.trf.xlu0
        %v2557 = vpop.trf.xlu0
        %2558 = vst [vmem:[%s516] sm:$0x3] %v2542
        %s2559 = sand.u32 %s318, 1
        %s2560 = scalar_lea.sflag [#allocation4], %s2559
        %s2561 = sand.u32 %s318, 1
        %s2562 = smul.addr %s2561, 2
        %s2563 = scalar_lea.vmem [#allocation11], %s2562
        // Predicated region
        $region93: #{tpu_custom_call.1} parent=71 // pred_check
          %p2564 = pneg %p328
        $region94: #{tpu_custom_call.1} parent=71 // pred_check_branch
          %2566 = sbr.rel (%p2564) target = $region96
        $region95: #{tpu_custom_call.1} parent=71 // pred_region
          %s2568 = ssub.s32 32, 32
          %2569 = vsyncadd %s2560, %s2568
          %s2570 = smul.addr %s32, 32
          %s2571 = scalar_lea.hbm %s13, %s2570
          %s2573 = sshll.u32 %s2563, 4
          %s2574 = int_to_ptr.vmem [resolvable:$true] %s2573
          %2576 = dma.vmem_to_hbm [thread:$0]  %s2574, 32, %s2571, %s2560
        $region96: #{tpu_custom_call.1} parent=71 // pred_fallthru
          _
      $region72: #{tpu_custom_call.1} parent=5 // pred_fallthru
        _
      %p2577 = scmp.le.s32.totalorder 2, %s27
      // Predicated region
      $region97: #{tpu_custom_call.1} parent=5 // pred_check
        %p2578 = pneg %p2577
      $region98: #{tpu_custom_call.1} parent=5 // pred_check_branch
        %2580 = sbr.rel (%p2578) target = $region100
      $region99: #{tpu_custom_call.1} parent=5 // pred_region
        %s2581 = ssub.s32 %s27, 2
        // Predicated region
        $region101: #{tpu_custom_call.1} parent=99 // pred_check
          %p2582 = pneg %p334
        $region102: #{tpu_custom_call.1} parent=99 // pred_check_branch
          %2584 = sbr.rel (%p2582) target = $region104
        $region103: #{tpu_custom_call.1} parent=99 // pred_region
          %s2585 = sand.u32 %s319, 1
          %s2586 = scalar_lea.sflag [#allocation4], %s2585
          %s2587 = sand.u32 %s319, 1
          %s2588 = smul.addr %s2587, 2
          %s2589 = scalar_lea.vmem [#allocation11], %s2588
          %2590 = dma.done %s2586, 32
        $region104: #{tpu_custom_call.1} parent=99 // pred_fallthru
          _
      $region100: #{tpu_custom_call.1} parent=5 // pred_fallthru
        _
    $region6: #{tpu_custom_call.1} parent=1 // loop_footer
      %s31 = sadd.s32 1, %s27
    $region7: #{tpu_custom_call.1} parent=1 // loop_footer_branch
      %26 = sbr.rel target = $region3
    $region8: #{tpu_custom_call.1} parent=1 // loop_exit
      _
    %2591 = vsyncpa [#allocation3], 1
    %s2592 = scalar_lea.sflag [#allocation3], 1
    %2593 = vsyncpa %s2592, 1
    %2594 = vsyncpa [#allocation6], 1
    %2595 = vsyncpa [#allocation9], 1
    %2596 = vsyncpa [#allocation4], 1
    %s2597 = scalar_lea.sflag [#allocation4], 1
    %2598 = vsyncpa %s2597, 1

</llo_original>
